<compile_context>
chip_gen: v7x
topology: tpu7x:2x2x1
jax: 0.10.0
libtpu: 0.0.40
codegen_flags: <defaults>
</compile_context>

<pallas_src>
from typing import Any, NamedTuple

import jax
import jax.numpy as jnp
from jax.experimental import pallas as pl
from jax.experimental.pallas import tpu as pltpu


def _round_up(n: int, m: int) -> int:
    return (n + m - 1) // m * m


def _vmem_capacity_bytes() -> int:
    """Per-TensorCore VMEM capacity; conservative (v7x = 64 MiB) fallback."""
    try:
        info = pltpu.get_tpu_info()
        cap = getattr(info, "vmem_capacity_bytes", None)
        if cap:
            return int(cap)
    except Exception:
        pass
    return 64 << 20


class RBFNParams(NamedTuple):
    c_t: Any        # [F_pad, M_pad]  matmul dtype -- centers, transposed
    c_sq: Any       # [1, M_pad]      f32          -- ||c||^2 per center
    inv_sig2: Any   # [1, M_pad]      f32          -- 1 / sigma^2
    wt: Any         # [M_pad, S_pad]  f32          -- linear weight, transposed
    b2: Any         # [1, S_pad]      f32          -- bias
    F: int
    M: int
    S: int
    F_pad: int
    M_pad: int
    S_pad: int
    matmul_dtype: Any


def rbfn_kernel(x_ref, xsq_ref, ct_ref, csq_ref, isig2_ref, wt_ref, b_ref, out_ref):
    # x_ref:     [TB, F_pad]    matmul dtype (bf16) -- batch tile (pipelined)
    # xsq_ref:   [TB, 128]      f32                 -- ||x||^2, replicated on lanes
    # ct_ref:    [F_pad, M_pad] matmul dtype        -- centers^T (resident)
    # csq_ref:   [1, M_pad]     f32                 -- ||c||^2 (resident)
    # isig2_ref: [1, M_pad]     f32                 -- 1/sigma^2 (resident)
    # wt_ref:    [M_pad, S_pad] f32                 -- W^T (resident)
    # b_ref:     [1, S_pad]     f32                 -- bias (resident)
    # out_ref:   [TB, S_pad]    f32
    xc = jnp.dot(x_ref[...], ct_ref[...], preferred_element_type=jnp.float32)  # MXU
    xsq = xsq_ref[...][:, :1]                                   # [TB, 1] f32
    dist2 = xsq + csq_ref[...] - 2.0 * xc
    dist = jnp.sqrt(jnp.maximum(dist2, 0.0))        # torch.norm(X[i] - C, dim=1)
    radial = jnp.exp(-dist * isig2_ref[...])        # exp(-dist / sigma^2)
    out_ref[...] = (
        jnp.dot(radial, wt_ref[...], preferred_element_type=jnp.float32) + b_ref[...]
    )


def rbfn_prepare(centers, sigma, weight, bias, *, matmul_dtype=jnp.bfloat16):
    """One-time parameter prep. Cache the result and reuse across forward calls
    so the per-call cost is only the kernel (plus tiny x-side prep)."""
    M, F = centers.shape
    S = weight.shape[0]
    F_pad = _round_up(F, 128)
    M_pad = _round_up(M, 128)
    S_pad = _round_up(S, 128)
    f32 = jnp.float32

    if (M, F) == (M_pad, F_pad):
        c_p = centers.astype(f32)
    else:
        c_p = jnp.zeros((M_pad, F_pad), f32).at[:M, :F].set(centers.astype(f32))

    c_sq = jnp.sum(c_p * c_p, axis=-1)[None, :]                 # [1, M_pad] f32
    # Padded sigma entries must be nonzero (their weight rows are zero anyway).
    sigma_p = jnp.ones((M_pad,), f32).at[:M].set(sigma.astype(f32))
    inv_sig2 = (1.0 / (sigma_p * sigma_p))[None, :]             # [1, M_pad] f32

    c_t = c_p.T.astype(matmul_dtype)                            # [F_pad, M_pad]
    # TODO(synk): for very large F (> ~16-24K) on v7x, stream centers^T over an
    # F-chunk grid axis with a VMEM f32 accumulator instead of full residency.

    wt = jnp.zeros((M_pad, S_pad), f32).at[:M, :S].set(weight.T.astype(f32))
    b2 = jnp.zeros((1, S_pad), f32).at[0, :S].set(bias.astype(f32))

    c_t, c_sq, inv_sig2, wt, b2 = jax.block_until_ready((c_t, c_sq, inv_sig2, wt, b2))
    return RBFNParams(c_t, c_sq, inv_sig2, wt, b2, F, M, S,
                      F_pad, M_pad, S_pad, matmul_dtype)


def rbfn_forward_prepared(x, params: RBFNParams, *, block_b=None):
    """x: [B, F] -> [B, S] f32, using precomputed/cached RBFNParams."""
    B, F = x.shape
    assert F == params.F, (F, params.F)
    F_pad, M_pad, S_pad = params.F_pad, params.M_pad, params.S_pad
    f32 = jnp.float32

    if block_b is None:
        block_b = 256                      # matches the 256-wide MXU on v6e/v7x
    # Min 16 rows so the bf16 x tile respects the (16, 128) packed min tile.
    block_b = max(16, _round_up(min(block_b, _round_up(B, 16)), 16))
    B_pad = _round_up(B, block_b)
    n_blocks = B_pad // block_b

    # ---- per-call x prep (pad copy is skipped when shapes already align)
    if B_pad == B and F_pad == F:
        x_f32 = x.astype(f32)
        x_mm = x.astype(params.matmul_dtype)
    else:
        x_f32 = jnp.zeros((B_pad, F_pad), f32).at[:B, :F].set(x.astype(f32))
        x_mm = x_f32.astype(params.matmul_dtype)
    x_sq = jnp.sum(x_f32 * x_f32, axis=-1, keepdims=True)       # [B_pad, 1] f32
    x_sq = jnp.broadcast_to(x_sq, (B_pad, 128))                 # lane-dense side input

    # ---- buffering depth & VMEM budget
    vmem_cap = _vmem_capacity_bytes()
    x_buffers = 3 if vmem_cap >= (100 << 20) else 2   # deeper x pipeline on v5e/v6e
    mm_bytes = jnp.dtype(params.matmul_dtype).itemsize
    resident = (F_pad * M_pad * mm_bytes              # centers^T
                + M_pad * S_pad * 4                   # W^T
                + 2 * 8 * M_pad * 4 + 8 * S_pad * 4)  # csq / inv_sig2 / bias
    streamed = x_buffers * (block_b * F_pad * mm_bytes + block_b * 128 * 4)
    out_bufs = 2 * block_b * S_pad * 4

    out_shape = jax.ShapeDtypeStruct((B_pad, S_pad), f32)

    def build_specs(buffered: bool):
        def spec(shape, index_map, nbuf):
            if buffered:
                return pl.BlockSpec(shape, index_map, pipeline_mode=pl.Buffered(nbuf))
            return pl.BlockSpec(shape, index_map)

        in_specs = [
            spec((block_b, F_pad), lambda i: (i, 0), x_buffers),  # x tile (pipelined)
            spec((block_b, 128), lambda i: (i, 0), x_buffers),    # ||x||^2 tile
            spec((F_pad, M_pad), lambda i: (0, 0), 1),            # centers^T (resident)
            spec((1, M_pad), lambda i: (0, 0), 1),                # ||c||^2 (resident)
            spec((1, M_pad), lambda i: (0, 0), 1),                # 1/sigma^2 (resident)
            spec((M_pad, S_pad), lambda i: (0, 0), 1),            # W^T (resident)
            spec((1, S_pad), lambda i: (0, 0), 1),                # bias (resident)
        ]
        out_specs = pl.BlockSpec((block_b, S_pad), lambda i: (i, 0))
        return in_specs, out_specs

    def run(buffered: bool):
        resident_mult = 1 if buffered else 2  # default pipelining double-buffers
        vmem_limit = int(1.3 * (resident_mult * resident + streamed + out_bufs))
        vmem_limit += 2 << 20
        vmem_limit = min(max(vmem_limit, 16 << 20), int(0.75 * vmem_cap))
        in_specs, out_specs = build_specs(buffered)
        return pl.pallas_call(
            rbfn_kernel,
            out_shape=out_shape,
            grid=(n_blocks,),
            in_specs=in_specs,
            out_specs=out_specs,
            compiler_params=pltpu.CompilerParams(
                dimension_semantics=("parallel",),
                vmem_limit_bytes=vmem_limit,
            ),
        )(x_mm, x_sq, params.c_t, params.c_sq, params.inv_sig2, params.wt, params.b2)

    if hasattr(pl, "Buffered"):
        try:
            out = run(True)
        except Exception:
            # Fallback if this jax build rejects pipeline_mode / Buffered(1).
            out = run(False)
    else:
        out = run(False)

    return out[:B, :params.S]


def rbfn_forward(x, centers, sigma, weight, bias, *, block_b=None,
                 matmul_dtype=jnp.bfloat16):
    """Convenience one-shot path (prep not cached). For repeated calls use
    rbfn_prepare() once + rbfn_forward_prepared()."""
    params = rbfn_prepare(centers, sigma, weight, bias, matmul_dtype=matmul_dtype)
    return rbfn_forward_prepared(x, params, block_b=block_b)


def rbfn_reference(x, centers, sigma, weight, bias):
    diff = x[:, None, :] - centers[None, :, :]                  # [B, M, F]
    dist = jnp.sqrt(jnp.sum(diff * diff, axis=-1))              # [B, M]
    radial = jnp.exp(-dist / (sigma[None, :] ** 2))             # [B, M]
    return radial @ weight.T + bias[None, :]                    # [B, S]


if __name__ == "__main__":
    # Small shapes consistent with the module's forward (real model uses
    # n_feature = 64*64*3 = 12288, m_hidden = 209, s_output = 2).  These sizes
    # intentionally exercise the F/M/S padding paths.
    batch = 8
    n_feature = 500
    m_hidden = 209
    s_output = 2

    key = jax.random.PRNGKey(0)
    k_x, k_c, k_w = jax.random.split(key, 3)

    x = jax.random.normal(k_x, (batch, n_feature), dtype=jnp.float32)
    # centers = train_set_x.clone() in the original module (data-dependent);
    # initialized here deterministically from PRNGKey(0).
    centers = jax.random.normal(k_c, (m_hidden, n_feature), dtype=jnp.float32)
    sigma = 1000.0 * jnp.ones((m_hidden,), dtype=jnp.float32)
    # nn.Linear init per initialize_weights(): weight ~ N(0, 50), bias = 0.
    weight = 50.0 * jax.random.normal(k_w, (s_output, m_hidden), dtype=jnp.float32)
    bias = jnp.zeros((s_output,), dtype=jnp.float32)

    # One-time (cacheable) parameter prep, then the per-call kernel path.
    params = rbfn_prepare(centers, sigma, weight, bias)
    out = rbfn_forward_prepared(x, params)
    out = jax.block_until_ready(out)

    ref = rbfn_reference(x, centers, sigma, weight, bias)
    assert out.shape == (batch, s_output)
    assert jnp.allclose(out, ref, rtol=2e-3, atol=5e-2), (out, ref)

    print("KERNEL_OK")
</pallas_src>

<mosaic_0001>
module attributes {stable_mosaic.version = 11 : i64} {
  func.func @rbfn_kernel(%arg0: i32, %arg1: memref<16x512xbf16, #tpu.memory_space<vmem>>, %arg2: memref<16x128xf32, #tpu.memory_space<vmem>>, %arg3: memref<512x256xbf16, #tpu.memory_space<vmem>>, %arg4: memref<1x256xf32, #tpu.memory_space<vmem>>, %arg5: memref<1x256xf32, #tpu.memory_space<vmem>>, %arg6: memref<256x128xf32, #tpu.memory_space<vmem>>, %arg7: memref<1x128xf32, #tpu.memory_space<vmem>>, %arg8: memref<16x128xf32, #tpu.memory_space<vmem>>) attributes {dimension_semantics = [#tpu.dimension_semantics<parallel>], iteration_bounds = array<i64: 1>, scalar_prefetch = 0 : i64, scratch_operands = 0 : i64, tpu.core_type = #tpu.core_type<tc>, window_params = [{pipeline_mode = #tpu.pipeline_mode<double_buffered>, transform_indices = @transform_0, window_bounds = array<i64: 16, 512>}, {pipeline_mode = #tpu.pipeline_mode<double_buffered>, transform_indices = @transform_1, window_bounds = array<i64: 16, 128>}, {pipeline_mode = #tpu.pipeline_mode<synchronous>, transform_indices = @transform_2, window_bounds = array<i64: 512, 256>}, {pipeline_mode = #tpu.pipeline_mode<synchronous>, transform_indices = @transform_3, window_bounds = array<i64: 1, 256>}, {pipeline_mode = #tpu.pipeline_mode<synchronous>, transform_indices = @transform_4, window_bounds = array<i64: 1, 256>}, {pipeline_mode = #tpu.pipeline_mode<synchronous>, transform_indices = @transform_5, window_bounds = array<i64: 256, 128>}, {pipeline_mode = #tpu.pipeline_mode<synchronous>, transform_indices = @transform_6, window_bounds = array<i64: 1, 128>}, {transform_indices = @transform_7, window_bounds = array<i64: 16, 128>}]} {
    %c0 = arith.constant 0 : index
    %c0_0 = arith.constant 0 : index
    %0 = vector.load %arg1[%c0, %c0_0] : memref<16x512xbf16, #tpu.memory_space<vmem>>, vector<16x512xbf16>
    %c0_1 = arith.constant 0 : index
    %c0_2 = arith.constant 0 : index
    %1 = vector.load %arg3[%c0_1, %c0_2] : memref<512x256xbf16, #tpu.memory_space<vmem>>, vector<512x256xbf16>
    %cst = arith.constant dense<0.000000e+00> : vector<16x256xf32>
    %2 = tpu.matmul %0, %1, %cst {dimension_numbers = #tpu.dot_dimension_numbers<[1], [0], [0], [1], [0, 0, 1, 1], [], []>} : vector<16x512xbf16>, vector<512x256xbf16>, vector<16x256xf32> -> vector<16x256xf32>
    %c0_3 = arith.constant 0 : index
    %c0_4 = arith.constant 0 : index
    %3 = vector.load %arg2[%c0_3, %c0_4] : memref<16x128xf32, #tpu.memory_space<vmem>>, vector<16x128xf32>
    %4 = vector.extract_strided_slice %3 {offsets = [0, 0], sizes = [16, 1], strides = [1, 1]} : vector<16x128xf32> to vector<16x1xf32>
    %c0_5 = arith.constant 0 : index
    %c0_6 = arith.constant 0 : index
    %5 = vector.load %arg4[%c0_5, %c0_6] : memref<1x256xf32, #tpu.memory_space<vmem>>, vector<1x256xf32>
    %6 = vector.broadcast %4 : vector<16x1xf32> to vector<16x256xf32>
    %7 = vector.broadcast %5 : vector<1x256xf32> to vector<16x256xf32>
    %8 = arith.addf %6, %7 : vector<16x256xf32>
    %cst_7 = arith.constant 2.000000e+00 : f32
    %9 = vector.broadcast %cst_7 : f32 to vector<16x256xf32>
    %10 = arith.mulf %9, %2 : vector<16x256xf32>
    %11 = arith.subf %8, %10 : vector<16x256xf32>
    %cst_8 = arith.constant 0.000000e+00 : f32
    %12 = vector.broadcast %cst_8 : f32 to vector<16x256xf32>
    %13 = arith.maximumf %11, %12 : vector<16x256xf32>
    %14 = math.sqrt %13 : vector<16x256xf32>
    %cst_9 = arith.constant 0.000000e+00 : f32
    %15 = vector.broadcast %cst_9 : f32 to vector<16x256xf32>
    %16 = arith.subf %15, %14 : vector<16x256xf32>
    %c0_10 = arith.constant 0 : index
    %c0_11 = arith.constant 0 : index
    %17 = vector.load %arg5[%c0_10, %c0_11] : memref<1x256xf32, #tpu.memory_space<vmem>>, vector<1x256xf32>
    %18 = vector.broadcast %17 : vector<1x256xf32> to vector<16x256xf32>
    %19 = arith.mulf %16, %18 : vector<16x256xf32>
    %20 = math.exp %19 : vector<16x256xf32>
    %c0_12 = arith.constant 0 : index
    %c0_13 = arith.constant 0 : index
    %21 = vector.load %arg6[%c0_12, %c0_13] : memref<256x128xf32, #tpu.memory_space<vmem>>, vector<256x128xf32>
    %cst_14 = arith.constant dense<0.000000e+00> : vector<16x128xf32>
    %22 = tpu.matmul %20, %21, %cst_14 {dimension_numbers = #tpu.dot_dimension_numbers<[1], [0], [0], [1], [0, 0, 1, 1], [], []>} : vector<16x256xf32>, vector<256x128xf32>, vector<16x128xf32> -> vector<16x128xf32>
    %c0_15 = arith.constant 0 : index
    %c0_16 = arith.constant 0 : index
    %23 = vector.load %arg7[%c0_15, %c0_16] : memref<1x128xf32, #tpu.memory_space<vmem>>, vector<1x128xf32>
    %24 = vector.broadcast %23 : vector<1x128xf32> to vector<16x128xf32>
    %25 = arith.addf %22, %24 : vector<16x128xf32>
    %c0_17 = arith.constant 0 : index
    %c0_18 = arith.constant 0 : index
    %26 = vector.load %arg8[%c0_17, %c0_18] : memref<16x128xf32, #tpu.memory_space<vmem>>, vector<16x128xf32>
    tpu.vector_store %arg8[%c0_17, %c0_18], %25 {strides = array<i32>} : memref<16x128xf32, #tpu.memory_space<vmem>>, vector<16x128xf32>,
    return
  }
  func.func @transform_0(%arg0: i32) -> (i32, i32) {
    %c0_i32 = arith.constant 0 : i32
    %c0_i32_0 = arith.constant 0 : i32
    return %arg0, %c0_i32 : i32, i32
  }
  func.func @transform_1(%arg0: i32) -> (i32, i32) {
    %c0_i32 = arith.constant 0 : i32
    %c0_i32_0 = arith.constant 0 : i32
    return %arg0, %c0_i32 : i32, i32
  }
  func.func @transform_2(%arg0: i32) -> (i32, i32) {
    %c0_i32 = arith.constant 0 : i32
    %c0_i32_0 = arith.constant 0 : i32
    %c0_i32_1 = arith.constant 0 : i32
    return %c0_i32, %c0_i32_0 : i32, i32
  }
  func.func @transform_3(%arg0: i32) -> (i32, i32) {
    %c0_i32 = arith.constant 0 : i32
    %c0_i32_0 = arith.constant 0 : i32
    %c0_i32_1 = arith.constant 0 : i32
    return %c0_i32, %c0_i32_0 : i32, i32
  }
  func.func @transform_4(%arg0: i32) -> (i32, i32) {
    %c0_i32 = arith.constant 0 : i32
    %c0_i32_0 = arith.constant 0 : i32
    %c0_i32_1 = arith.constant 0 : i32
    return %c0_i32, %c0_i32_0 : i32, i32
  }
  func.func @transform_5(%arg0: i32) -> (i32, i32) {
    %c0_i32 = arith.constant 0 : i32
    %c0_i32_0 = arith.constant 0 : i32
    %c0_i32_1 = arith.constant 0 : i32
    return %c0_i32, %c0_i32_0 : i32, i32
  }
  func.func @transform_6(%arg0: i32) -> (i32, i32) {
    %c0_i32 = arith.constant 0 : i32
    %c0_i32_0 = arith.constant 0 : i32
    %c0_i32_1 = arith.constant 0 : i32
    return %c0_i32, %c0_i32_0 : i32, i32
  }
  func.func @transform_7(%arg0: i32) -> (i32, i32) {
    %c0_i32 = arith.constant 0 : i32
    %c0_i32_0 = arith.constant 0 : i32
    return %arg0, %c0_i32 : i32, i32
  }
}

module attributes {stable_mosaic.version = 11 : i64} {
  func.func @rbfn_kernel(%arg0: i32, %arg1: memref<16x512xbf16, #tpu.memory_space<vmem>>, %arg2: memref<16x128xf32, #tpu.memory_space<vmem>>, %arg3: memref<512x256xbf16, #tpu.memory_space<vmem>>, %arg4: memref<1x256xf32, #tpu.memory_space<vmem>>, %arg5: memref<1x256xf32, #tpu.memory_space<vmem>>, %arg6: memref<256x128xf32, #tpu.memory_space<vmem>>, %arg7: memref<1x128xf32, #tpu.memory_space<vmem>>, %arg8: memref<16x128xf32, #tpu.memory_space<vmem>>) attributes {dimension_semantics = [#tpu.dimension_semantics<parallel>], iteration_bounds = array<i64: 1>, scalar_prefetch = 0 : i64, scratch_operands = 0 : i64, tpu.core_type = #tpu.core_type<tc>, window_params = [{transform_indices = @transform_0, window_bounds = array<i64: 16, 512>}, {transform_indices = @transform_1, window_bounds = array<i64: 16, 128>}, {pipeline_mode = #tpu.pipeline_mode<synchronous>, transform_indices = @transform_2, window_bounds = array<i64: 512, 256>}, {pipeline_mode = #tpu.pipeline_mode<synchronous>, transform_indices = @transform_3, window_bounds = array<i64: 1, 256>}, {pipeline_mode = #tpu.pipeline_mode<synchronous>, transform_indices = @transform_4, window_bounds = array<i64: 1, 256>}, {pipeline_mode = #tpu.pipeline_mode<synchronous>, transform_indices = @transform_5, window_bounds = array<i64: 256, 128>}, {pipeline_mode = #tpu.pipeline_mode<synchronous>, transform_indices = @transform_6, window_bounds = array<i64: 1, 128>}, {transform_indices = @transform_7, window_bounds = array<i64: 16, 128>}]} {
    %c0 = arith.constant 0 : index
    %c0_0 = arith.constant 0 : index
    %0 = vector.load %arg1[%c0, %c0_0] : memref<16x512xbf16, #tpu.memory_space<vmem>>, vector<16x512xbf16>
    %c0_1 = arith.constant 0 : index
    %c0_2 = arith.constant 0 : index
    %1 = vector.load %arg3[%c0_1, %c0_2] : memref<512x256xbf16, #tpu.memory_space<vmem>>, vector<512x256xbf16>
    %cst = arith.constant dense<0.000000e+00> : vector<16x256xf32>
    %2 = tpu.matmul %0, %1, %cst {dimension_numbers = #tpu.dot_dimension_numbers<[1], [0], [0], [1], [0, 0, 1, 1], [], []>} : vector<16x512xbf16>, vector<512x256xbf16>, vector<16x256xf32> -> vector<16x256xf32>
    %c0_3 = arith.constant 0 : index
    %c0_4 = arith.constant 0 : index
    %3 = vector.load %arg2[%c0_3, %c0_4] : memref<16x128xf32, #tpu.memory_space<vmem>>, vector<16x128xf32>
    %4 = vector.extract_strided_slice %3 {offsets = [0, 0], sizes = [16, 1], strides = [1, 1]} : vector<16x128xf32> to vector<16x1xf32>
    %c0_5 = arith.constant 0 : index
    %c0_6 = arith.constant 0 : index
    %5 = vector.load %arg4[%c0_5, %c0_6] : memref<1x256xf32, #tpu.memory_space<vmem>>, vector<1x256xf32>
    %6 = vector.broadcast %4 : vector<16x1xf32> to vector<16x256xf32>
    %7 = vector.broadcast %5 : vector<1x256xf32> to vector<16x256xf32>
    %8 = arith.addf %6, %7 : vector<16x256xf32>
    %cst_7 = arith.constant 2.000000e+00 : f32
    %9 = vector.broadcast %cst_7 : f32 to vector<16x256xf32>
    %10 = arith.mulf %9, %2 : vector<16x256xf32>
    %11 = arith.subf %8, %10 : vector<16x256xf32>
    %cst_8 = arith.constant 0.000000e+00 : f32
    %12 = vector.broadcast %cst_8 : f32 to vector<16x256xf32>
    %13 = arith.maximumf %11, %12 : vector<16x256xf32>
    %14 = math.sqrt %13 : vector<16x256xf32>
    %cst_9 = arith.constant 0.000000e+00 : f32
    %15 = vector.broadcast %cst_9 : f32 to vector<16x256xf32>
    %16 = arith.subf %15, %14 : vector<16x256xf32>
    %c0_10 = arith.constant 0 : index
    %c0_11 = arith.constant 0 : index
    %17 = vector.load %arg5[%c0_10, %c0_11] : memref<1x256xf32, #tpu.memory_space<vmem>>, vector<1x256xf32>
    %18 = vector.broadcast %17 : vector<1x256xf32> to vector<16x256xf32>
    %19 = arith.mulf %16, %18 : vector<16x256xf32>
    %20 = math.exp %19 : vector<16x256xf32>
    %c0_12 = arith.constant 0 : index
    %c0_13 = arith.constant 0 : index
    %21 = vector.load %arg6[%c0_12, %c0_13] : memref<256x128xf32, #tpu.memory_space<vmem>>, vector<256x128xf32>
    %cst_14 = arith.constant dense<0.000000e+00> : vector<16x128xf32>
    %22 = tpu.matmul %20, %21, %cst_14 {dimension_numbers = #tpu.dot_dimension_numbers<[1], [0], [0], [1], [0, 0, 1, 1], [], []>} : vector<16x256xf32>, vector<256x128xf32>, vector<16x128xf32> -> vector<16x128xf32>
    %c0_15 = arith.constant 0 : index
    %c0_16 = arith.constant 0 : index
    %23 = vector.load %arg7[%c0_15, %c0_16] : memref<1x128xf32, #tpu.memory_space<vmem>>, vector<1x128xf32>
    %24 = vector.broadcast %23 : vector<1x128xf32> to vector<16x128xf32>
    %25 = arith.addf %22, %24 : vector<16x128xf32>
    %c0_17 = arith.constant 0 : index
    %c0_18 = arith.constant 0 : index
    %26 = vector.load %arg8[%c0_17, %c0_18] : memref<16x128xf32, #tpu.memory_space<vmem>>, vector<16x128xf32>
    tpu.vector_store %arg8[%c0_17, %c0_18], %25 {strides = array<i32>} : memref<16x128xf32, #tpu.memory_space<vmem>>, vector<16x128xf32>,
    return
  }
  func.func @transform_0(%arg0: i32) -> (i32, i32) {
    %c0_i32 = arith.constant 0 : i32
    %c0_i32_0 = arith.constant 0 : i32
    return %arg0, %c0_i32 : i32, i32
  }
  func.func @transform_1(%arg0: i32) -> (i32, i32) {
    %c0_i32 = arith.constant 0 : i32
    %c0_i32_0 = arith.constant 0 : i32
    return %arg0, %c0_i32 : i32, i32
  }
  func.func @transform_2(%arg0: i32) -> (i32, i32) {
    %c0_i32 = arith.constant 0 : i32
    %c0_i32_0 = arith.constant 0 : i32
    %c0_i32_1 = arith.constant 0 : i32
    return %c0_i32, %c0_i32_0 : i32, i32
  }
  func.func @transform_3(%arg0: i32) -> (i32, i32) {
    %c0_i32 = arith.constant 0 : i32
    %c0_i32_0 = arith.constant 0 : i32
    %c0_i32_1 = arith.constant 0 : i32
    return %c0_i32, %c0_i32_0 : i32, i32
  }
  func.func @transform_4(%arg0: i32) -> (i32, i32) {
    %c0_i32 = arith.constant 0 : i32
    %c0_i32_0 = arith.constant 0 : i32
    %c0_i32_1 = arith.constant 0 : i32
    return %c0_i32, %c0_i32_0 : i32, i32
  }
  func.func @transform_5(%arg0: i32) -> (i32, i32) {
    %c0_i32 = arith.constant 0 : i32
    %c0_i32_0 = arith.constant 0 : i32
    %c0_i32_1 = arith.constant 0 : i32
    return %c0_i32, %c0_i32_0 : i32, i32
  }
  func.func @transform_6(%arg0: i32) -> (i32, i32) {
    %c0_i32 = arith.constant 0 : i32
    %c0_i32_0 = arith.constant 0 : i32
    %c0_i32_1 = arith.constant 0 : i32
    return %c0_i32, %c0_i32_0 : i32, i32
  }
  func.func @transform_7(%arg0: i32) -> (i32, i32) {
    %c0_i32 = arith.constant 0 : i32
    %c0_i32_0 = arith.constant 0 : i32
    return %arg0, %c0_i32 : i32, i32
  }
}

</mosaic_0001>

<llo_original>
// kernel: tpu_custom_call.1
$region0: #{tpu_custom_call.1}
  #allocation0 [shape = 'u32[]', space=smem, size = 0x4, offset = 0x4, fixed_abs, tag = 'smem constant byte address 0x4 - core index']
  #allocation1 [shape = 'u32[144,128]{1,0:T(1,128)}', space=vmem, size = 0x12000, scoped, tag = 'internal scratch']
  %s0 = inlined_call_operand.hbm [shape: bf16[16,512], index: 0, kind: input, shape index: {}]
  %s1 = inlined_call_operand.hbm [shape: f32[16,128], index: 1, kind: input, shape index: {}]
  %s2 = inlined_call_operand.hbm [shape: bf16[512,256], index: 2, kind: input, shape index: {}]
  %s3 = inlined_call_operand.vmem [shape: f32[1,256], index: 3, kind: input, shape index: {}]
  %s4 = inlined_call_operand.vmem [shape: f32[1,256], index: 4, kind: input, shape index: {}]
  %s5 = inlined_call_operand.hbm [shape: f32[256,128], index: 5, kind: input, shape index: {}]
  %s6 = inlined_call_operand.vmem [shape: f32[1,128], index: 6, kind: input, shape index: {}]
  %s7 = inlined_call_operand.hbm [shape: f32[16,128], index: 7, kind: output, shape index: {}]
  %s8 = sld [smem:[#allocation0]]
  $region54: #{tpu_custom_call.1} parent=0
    _
  %s10 = ssub.s32 1, %s8
  %s11 = scalar_select 0, %s10, %s8
  $region1: #{tpu_custom_call.1} parent=0
    #allocation2 [shape = 'u8[16384]{0}', space=vmem, size = 0x4000, scoped, tag = 'input window, operand 0, single buffered']
    #allocation3 [shape = 's32[1]{0}', space=sflag, size = 0x4, scoped, tag = 'scoped memory for tpu_custom_call.1']
    #allocation4 [shape = 's32[1]{0}', space=sflag, size = 0x4, scoped, tag = 'scoped memory for tpu_custom_call.1']
    #allocation5 [shape = 'u8[8192]{0}', space=vmem, size = 0x2000, scoped, tag = 'input window, operand 1, single buffered']
    #allocation6 [shape = 's32[1]{0}', space=sflag, size = 0x4, scoped, tag = 'scoped memory for tpu_custom_call.1']
    #allocation7 [shape = 'u8[262144]{0}', space=vmem, size = 0x40000, scoped, tag = 'input window, operand 2, single buffered']
    #allocation8 [shape = 'u8[131072]{0}', space=vmem, size = 0x20000, scoped, tag = 'input window, operand 5, single buffered']
    #allocation9 [shape = 's32[1]{0}', space=sflag, size = 0x4, scoped, tag = 'scoped memory for tpu_custom_call.1']
    #allocation10 [shape = 'u8[8192]{0}', space=vmem, size = 0x2000, scoped, tag = 'output window, operand 0, single buffered']
    %12 = vsyncpa [#allocation3], 0
    %13 = vsyncpa [#allocation6], 0
    %14 = vsyncpa [#allocation9], 0
    %15 = vsyncpa [#allocation4], 0
    // Predicated region
    $region2: #{tpu_custom_call.1} parent=1 // pred_check
      _
    $region3: #{tpu_custom_call.1} parent=1 // pred_check_branch
      %17 = sbr.rel (0) target = $region5
    $region4: #{tpu_custom_call.1} parent=1 // pred_region
      %s19 = ssub.s32 512, 512
      %20 = vsyncadd [#allocation3], %s19
      %s21 = sshll.u32 [#allocation2], 4
      %s22 = int_to_ptr.vmem [resolvable:$true] %s21
      %27 = dma.hbm_to_vmem [thread:$0]  %s0, 512, %s22, [#allocation3], 256, 256, 16
    $region5: #{tpu_custom_call.1} parent=1 // pred_fallthru
      _
    // Predicated region
    $region6: #{tpu_custom_call.1} parent=1 // pred_check
      _
    $region7: #{tpu_custom_call.1} parent=1 // pred_check_branch
      %29 = sbr.rel (0) target = $region9
    $region8: #{tpu_custom_call.1} parent=1 // pred_region
      %s31 = ssub.s32 256, 256
      %32 = vsyncadd [#allocation6], %s31
      %s33 = sshll.u32 [#allocation5], 4
      %s34 = int_to_ptr.vmem [resolvable:$true] %s33
      %39 = dma.hbm_to_vmem [thread:$0]  %s1, 256, %s34, [#allocation6], 128, 128, 8
    $region9: #{tpu_custom_call.1} parent=1 // pred_fallthru
      _
    // Predicated region
    $region10: #{tpu_custom_call.1} parent=1 // pred_check
      _
    $region11: #{tpu_custom_call.1} parent=1 // pred_check_branch
      %41 = sbr.rel (0) target = $region13
    $region12: #{tpu_custom_call.1} parent=1 // pred_region
      %s43 = ssub.s32 8192, 8192
      %44 = vsyncadd [#allocation6], %s43
      %s45 = sshll.u32 [#allocation7], 4
      %s46 = int_to_ptr.vmem [resolvable:$true] %s45
      %51 = dma.hbm_to_vmem [thread:$0]  %s2, 8192, %s46, [#allocation6], 128, 128, 8
    $region13: #{tpu_custom_call.1} parent=1 // pred_fallthru
      _
    // Predicated region
    $region14: #{tpu_custom_call.1} parent=1 // pred_check
      _
    $region15: #{tpu_custom_call.1} parent=1 // pred_check_branch
      %53 = sbr.rel (0) target = $region17
    $region16: #{tpu_custom_call.1} parent=1 // pred_region
      _
    $region17: #{tpu_custom_call.1} parent=1 // pred_fallthru
      _
    // Predicated region
    $region18: #{tpu_custom_call.1} parent=1 // pred_check
      _
    $region19: #{tpu_custom_call.1} parent=1 // pred_check_branch
      %55 = sbr.rel (0) target = $region21
    $region20: #{tpu_custom_call.1} parent=1 // pred_region
      _
    $region21: #{tpu_custom_call.1} parent=1 // pred_fallthru
      _
    // Predicated region
    $region22: #{tpu_custom_call.1} parent=1 // pred_check
      _
    $region23: #{tpu_custom_call.1} parent=1 // pred_check_branch
      %57 = sbr.rel (0) target = $region25
    $region24: #{tpu_custom_call.1} parent=1 // pred_region
      %s59 = ssub.s32 4096, 4096
      %60 = vsyncadd [#allocation9], %s59
      %s61 = sshll.u32 [#allocation8], 4
      %s62 = int_to_ptr.vmem [resolvable:$true] %s61
      %67 = dma.hbm_to_vmem [thread:$0]  %s5, 4096, %s62, [#allocation9], 128, 128, 8
    $region25: #{tpu_custom_call.1} parent=1 // pred_fallthru
      _
    // Predicated region
    $region26: #{tpu_custom_call.1} parent=1 // pred_check
      _
    $region27: #{tpu_custom_call.1} parent=1 // pred_check_branch
      %69 = sbr.rel (0) target = $region29
    $region28: #{tpu_custom_call.1} parent=1 // pred_region
      _
    $region29: #{tpu_custom_call.1} parent=1 // pred_fallthru
      _
    // Predicated region
    $region30: #{tpu_custom_call.1} parent=1 // pred_check
      _
    $region31: #{tpu_custom_call.1} parent=1 // pred_check_branch
      %71 = sbr.rel (0) target = $region33
    $region32: #{tpu_custom_call.1} parent=1 // pred_region
      %72 = dma.done [#allocation3], 512
    $region33: #{tpu_custom_call.1} parent=1 // pred_fallthru
      _
    // Predicated region
    $region34: #{tpu_custom_call.1} parent=1 // pred_check
      _
    $region35: #{tpu_custom_call.1} parent=1 // pred_check_branch
      %74 = sbr.rel (0) target = $region37
    $region36: #{tpu_custom_call.1} parent=1 // pred_region
      %75 = dma.done [#allocation6], 256
    $region37: #{tpu_custom_call.1} parent=1 // pred_fallthru
      _
    // Predicated region
    $region38: #{tpu_custom_call.1} parent=1 // pred_check
      _
    $region39: #{tpu_custom_call.1} parent=1 // pred_check_branch
      %77 = sbr.rel (0) target = $region41
    $region40: #{tpu_custom_call.1} parent=1 // pred_region
      %78 = dma.done [#allocation6], 8192
    $region41: #{tpu_custom_call.1} parent=1 // pred_fallthru
      _
    // Predicated region
    $region42: #{tpu_custom_call.1} parent=1 // pred_check
      _
    $region43: #{tpu_custom_call.1} parent=1 // pred_check_branch
      %80 = sbr.rel (0) target = $region45
    $region44: #{tpu_custom_call.1} parent=1 // pred_region
      %81 = dma.done [#allocation9], 4096
    $region45: #{tpu_custom_call.1} parent=1 // pred_fallthru
      _
    %v82 = vld [vmem:[#allocation2] sm:$0xff]
    %v83 = vld [vmem:[#allocation2 + $0x8] sm:$0xff]
    %v84 = vld [vmem:[#allocation2 + $0x10] sm:$0xff]
    %v85 = vld [vmem:[#allocation2 + $0x18] sm:$0xff]
    %v86 = vld [vmem:[#allocation7] sm:$0xff]
    %v87 = vld [vmem:[#allocation7 + $0x8] sm:$0xff]
    %v88 = vld [vmem:[#allocation7 + $0x10] sm:$0xff]
    %v89 = vld [vmem:[#allocation7 + $0x18] sm:$0xff]
    %v90 = vld [vmem:[#allocation7 + $0x20] sm:$0xff]
    %v91 = vld [vmem:[#allocation7 + $0x28] sm:$0xff]
    %v92 = vld [vmem:[#allocation7 + $0x30] sm:$0xff]
    %v93 = vld [vmem:[#allocation7 + $0x38] sm:$0xff]
    %v94 = vld [vmem:[#allocation7 + $0x40] sm:$0xff]
    %v95 = vld [vmem:[#allocation7 + $0x48] sm:$0xff]
    %v96 = vld [vmem:[#allocation7 + $0x50] sm:$0xff]
    %v97 = vld [vmem:[#allocation7 + $0x58] sm:$0xff]
    %v98 = vld [vmem:[#allocation7 + $0x60] sm:$0xff]
    %v99 = vld [vmem:[#allocation7 + $0x68] sm:$0xff]
    %v100 = vld [vmem:[#allocation7 + $0x70] sm:$0xff]
    %v101 = vld [vmem:[#allocation7 + $0x78] sm:$0xff]
    %v102 = vld [vmem:[#allocation7 + $0x80] sm:$0xff]
    %v103 = vld [vmem:[#allocation7 + $0x88] sm:$0xff]
    %v104 = vld [vmem:[#allocation7 + $0x90] sm:$0xff]
    %v105 = vld [vmem:[#allocation7 + $0x98] sm:$0xff]
    %v106 = vld [vmem:[#allocation7 + $0xa0] sm:$0xff]
    %v107 = vld [vmem:[#allocation7 + $0xa8] sm:$0xff]
    %v108 = vld [vmem:[#allocation7 + $0xb0] sm:$0xff]
    %v109 = vld [vmem:[#allocation7 + $0xb8] sm:$0xff]
    %v110 = vld [vmem:[#allocation7 + $0xc0] sm:$0xff]
    %v111 = vld [vmem:[#allocation7 + $0xc8] sm:$0xff]
    %v112 = vld [vmem:[#allocation7 + $0xd0] sm:$0xff]
    %v113 = vld [vmem:[#allocation7 + $0xd8] sm:$0xff]
    %v114 = vld [vmem:[#allocation7 + $0xe0] sm:$0xff]
    %v115 = vld [vmem:[#allocation7 + $0xe8] sm:$0xff]
    %v116 = vld [vmem:[#allocation7 + $0xf0] sm:$0xff]
    %v117 = vld [vmem:[#allocation7 + $0xf8] sm:$0xff]
    %v118 = vld [vmem:[#allocation7 + $0x100] sm:$0xff]
    %v119 = vld [vmem:[#allocation7 + $0x108] sm:$0xff]
    %v120 = vld [vmem:[#allocation7 + $0x110] sm:$0xff]
    %v121 = vld [vmem:[#allocation7 + $0x118] sm:$0xff]
    %v122 = vld [vmem:[#allocation7 + $0x120] sm:$0xff]
    %v123 = vld [vmem:[#allocation7 + $0x128] sm:$0xff]
    %v124 = vld [vmem:[#allocation7 + $0x130] sm:$0xff]
    %v125 = vld [vmem:[#allocation7 + $0x138] sm:$0xff]
    %v126 = vld [vmem:[#allocation7 + $0x140] sm:$0xff]
    %v127 = vld [vmem:[#allocation7 + $0x148] sm:$0xff]
    %v128 = vld [vmem:[#allocation7 + $0x150] sm:$0xff]
    %v129 = vld [vmem:[#allocation7 + $0x158] sm:$0xff]
    %v130 = vld [vmem:[#allocation7 + $0x160] sm:$0xff]
    %v131 = vld [vmem:[#allocation7 + $0x168] sm:$0xff]
    %v132 = vld [vmem:[#allocation7 + $0x170] sm:$0xff]
    %v133 = vld [vmem:[#allocation7 + $0x178] sm:$0xff]
    %v134 = vld [vmem:[#allocation7 + $0x180] sm:$0xff]
    %v135 = vld [vmem:[#allocation7 + $0x188] sm:$0xff]
    %v136 = vld [vmem:[#allocation7 + $0x190] sm:$0xff]
    %v137 = vld [vmem:[#allocation7 + $0x198] sm:$0xff]
    %v138 = vld [vmem:[#allocation7 + $0x1a0] sm:$0xff]
    %v139 = vld [vmem:[#allocation7 + $0x1a8] sm:$0xff]
    %v140 = vld [vmem:[#allocation7 + $0x1b0] sm:$0xff]
    %v141 = vld [vmem:[#allocation7 + $0x1b8] sm:$0xff]
    %v142 = vld [vmem:[#allocation7 + $0x1c0] sm:$0xff]
    %v143 = vld [vmem:[#allocation7 + $0x1c8] sm:$0xff]
    %v144 = vld [vmem:[#allocation7 + $0x1d0] sm:$0xff]
    %v145 = vld [vmem:[#allocation7 + $0x1d8] sm:$0xff]
    %v146 = vld [vmem:[#allocation7 + $0x1e0] sm:$0xff]
    %v147 = vld [vmem:[#allocation7 + $0x1e8] sm:$0xff]
    %v148 = vld [vmem:[#allocation7 + $0x1f0] sm:$0xff]
    %v149 = vld [vmem:[#allocation7 + $0x1f8] sm:$0xff]
    %v154 = vunpack.c.l.b16 %v82
    %v155 = vunpack.c.h.b16 %v82
    %v156 = vunpack.c.l.b16 %v83
    %v157 = vunpack.c.h.b16 %v83
    %v158 = vunpack.c.l.b16 %v84
    %v159 = vunpack.c.h.b16 %v84
    %v160 = vunpack.c.l.b16 %v85
    %v161 = vunpack.c.h.b16 %v85
    %v162 = vpack.c.b16 %v158, %v154
    %v163 = vpack.c.b16 %v159, %v155
    %v164 = vpack.c.b16 %v160, %v156
    %v165 = vpack.c.b16 %v161, %v157
    %v234 = vunpack.c.l.b16 %v86
    %v235 = vunpack.c.h.b16 %v86
    %v236 = vunpack.c.l.b16 %v87
    %v237 = vunpack.c.h.b16 %v87
    %v238 = vunpack.c.l.b16 %v88
    %v239 = vunpack.c.h.b16 %v88
    %v240 = vunpack.c.l.b16 %v89
    %v241 = vunpack.c.h.b16 %v89
    %v242 = vunpack.c.l.b16 %v90
    %v243 = vunpack.c.h.b16 %v90
    %v244 = vunpack.c.l.b16 %v91
    %v245 = vunpack.c.h.b16 %v91
    %v246 = vunpack.c.l.b16 %v92
    %v247 = vunpack.c.h.b16 %v92
    %v248 = vunpack.c.l.b16 %v93
    %v249 = vunpack.c.h.b16 %v93
    %v250 = vunpack.c.l.b16 %v94
    %v251 = vunpack.c.h.b16 %v94
    %v252 = vunpack.c.l.b16 %v95
    %v253 = vunpack.c.h.b16 %v95
    %v254 = vunpack.c.l.b16 %v96
    %v255 = vunpack.c.h.b16 %v96
    %v256 = vunpack.c.l.b16 %v97
    %v257 = vunpack.c.h.b16 %v97
    %v258 = vunpack.c.l.b16 %v98
    %v259 = vunpack.c.h.b16 %v98
    %v260 = vunpack.c.l.b16 %v99
    %v261 = vunpack.c.h.b16 %v99
    %v262 = vunpack.c.l.b16 %v100
    %v263 = vunpack.c.h.b16 %v100
    %v264 = vunpack.c.l.b16 %v101
    %v265 = vunpack.c.h.b16 %v101
    %v266 = vunpack.c.l.b16 %v102
    %v267 = vunpack.c.h.b16 %v102
    %v268 = vunpack.c.l.b16 %v103
    %v269 = vunpack.c.h.b16 %v103
    %v270 = vunpack.c.l.b16 %v104
    %v271 = vunpack.c.h.b16 %v104
    %v272 = vunpack.c.l.b16 %v105
    %v273 = vunpack.c.h.b16 %v105
    %v274 = vunpack.c.l.b16 %v106
    %v275 = vunpack.c.h.b16 %v106
    %v276 = vunpack.c.l.b16 %v107
    %v277 = vunpack.c.h.b16 %v107
    %v278 = vunpack.c.l.b16 %v108
    %v279 = vunpack.c.h.b16 %v108
    %v280 = vunpack.c.l.b16 %v109
    %v281 = vunpack.c.h.b16 %v109
    %v282 = vunpack.c.l.b16 %v110
    %v283 = vunpack.c.h.b16 %v110
    %v284 = vunpack.c.l.b16 %v111
    %v285 = vunpack.c.h.b16 %v111
    %v286 = vunpack.c.l.b16 %v112
    %v287 = vunpack.c.h.b16 %v112
    %v288 = vunpack.c.l.b16 %v113
    %v289 = vunpack.c.h.b16 %v113
    %v290 = vunpack.c.l.b16 %v114
    %v291 = vunpack.c.h.b16 %v114
    %v292 = vunpack.c.l.b16 %v115
    %v293 = vunpack.c.h.b16 %v115
    %v294 = vunpack.c.l.b16 %v116
    %v295 = vunpack.c.h.b16 %v116
    %v296 = vunpack.c.l.b16 %v117
    %v297 = vunpack.c.h.b16 %v117
    %v298 = vunpack.c.l.b16 %v118
    %v299 = vunpack.c.h.b16 %v118
    %v300 = vunpack.c.l.b16 %v119
    %v301 = vunpack.c.h.b16 %v119
    %v302 = vunpack.c.l.b16 %v120
    %v303 = vunpack.c.h.b16 %v120
    %v304 = vunpack.c.l.b16 %v121
    %v305 = vunpack.c.h.b16 %v121
    %v306 = vunpack.c.l.b16 %v122
    %v307 = vunpack.c.h.b16 %v122
    %v308 = vunpack.c.l.b16 %v123
    %v309 = vunpack.c.h.b16 %v123
    %v310 = vunpack.c.l.b16 %v124
    %v311 = vunpack.c.h.b16 %v124
    %v312 = vunpack.c.l.b16 %v125
    %v313 = vunpack.c.h.b16 %v125
    %v314 = vunpack.c.l.b16 %v126
    %v315 = vunpack.c.h.b16 %v126
    %v316 = vunpack.c.l.b16 %v127
    %v317 = vunpack.c.h.b16 %v127
    %v318 = vunpack.c.l.b16 %v128
    %v319 = vunpack.c.h.b16 %v128
    %v320 = vunpack.c.l.b16 %v129
    %v321 = vunpack.c.h.b16 %v129
    %v322 = vunpack.c.l.b16 %v130
    %v323 = vunpack.c.h.b16 %v130
    %v324 = vunpack.c.l.b16 %v131
    %v325 = vunpack.c.h.b16 %v131
    %v326 = vunpack.c.l.b16 %v132
    %v327 = vunpack.c.h.b16 %v132
    %v328 = vunpack.c.l.b16 %v133
    %v329 = vunpack.c.h.b16 %v133
    %v330 = vunpack.c.l.b16 %v134
    %v331 = vunpack.c.h.b16 %v134
    %v332 = vunpack.c.l.b16 %v135
    %v333 = vunpack.c.h.b16 %v135
    %v334 = vunpack.c.l.b16 %v136
    %v335 = vunpack.c.h.b16 %v136
    %v336 = vunpack.c.l.b16 %v137
    %v337 = vunpack.c.h.b16 %v137
    %v338 = vunpack.c.l.b16 %v138
    %v339 = vunpack.c.h.b16 %v138
    %v340 = vunpack.c.l.b16 %v139
    %v341 = vunpack.c.h.b16 %v139
    %v342 = vunpack.c.l.b16 %v140
    %v343 = vunpack.c.h.b16 %v140
    %v344 = vunpack.c.l.b16 %v141
    %v345 = vunpack.c.h.b16 %v141
    %v346 = vunpack.c.l.b16 %v142
    %v347 = vunpack.c.h.b16 %v142
    %v348 = vunpack.c.l.b16 %v143
    %v349 = vunpack.c.h.b16 %v143
    %v350 = vunpack.c.l.b16 %v144
    %v351 = vunpack.c.h.b16 %v144
    %v352 = vunpack.c.l.b16 %v145
    %v353 = vunpack.c.h.b16 %v145
    %v354 = vunpack.c.l.b16 %v146
    %v355 = vunpack.c.h.b16 %v146
    %v356 = vunpack.c.l.b16 %v147
    %v357 = vunpack.c.h.b16 %v147
    %v358 = vunpack.c.l.b16 %v148
    %v359 = vunpack.c.h.b16 %v148
    %v360 = vunpack.c.l.b16 %v149
    %v361 = vunpack.c.h.b16 %v149
    %v362 = vpack.c.b16 %v236, %v234
    %v363 = vpack.c.b16 %v237, %v235
    %v364 = vpack.c.b16 %v240, %v238
    %v365 = vpack.c.b16 %v241, %v239
    %v366 = vpack.c.b16 %v244, %v242
    %v367 = vpack.c.b16 %v245, %v243
    %v368 = vpack.c.b16 %v248, %v246
    %v369 = vpack.c.b16 %v249, %v247
    %v370 = vpack.c.b16 %v252, %v250
    %v371 = vpack.c.b16 %v253, %v251
    %v372 = vpack.c.b16 %v256, %v254
    %v373 = vpack.c.b16 %v257, %v255
    %v374 = vpack.c.b16 %v260, %v258
    %v375 = vpack.c.b16 %v261, %v259
    %v376 = vpack.c.b16 %v264, %v262
    %v377 = vpack.c.b16 %v265, %v263
    %v378 = vpack.c.b16 %v268, %v266
    %v379 = vpack.c.b16 %v269, %v267
    %v380 = vpack.c.b16 %v272, %v270
    %v381 = vpack.c.b16 %v273, %v271
    %v382 = vpack.c.b16 %v276, %v274
    %v383 = vpack.c.b16 %v277, %v275
    %v384 = vpack.c.b16 %v280, %v278
    %v385 = vpack.c.b16 %v281, %v279
    %v386 = vpack.c.b16 %v284, %v282
    %v387 = vpack.c.b16 %v285, %v283
    %v388 = vpack.c.b16 %v288, %v286
    %v389 = vpack.c.b16 %v289, %v287
    %v390 = vpack.c.b16 %v292, %v290
    %v391 = vpack.c.b16 %v293, %v291
    %v392 = vpack.c.b16 %v296, %v294
    %v393 = vpack.c.b16 %v297, %v295
    %v394 = vpack.c.b16 %v300, %v298
    %v395 = vpack.c.b16 %v301, %v299
    %v396 = vpack.c.b16 %v304, %v302
    %v397 = vpack.c.b16 %v305, %v303
    %v398 = vpack.c.b16 %v308, %v306
    %v399 = vpack.c.b16 %v309, %v307
    %v400 = vpack.c.b16 %v312, %v310
    %v401 = vpack.c.b16 %v313, %v311
    %v402 = vpack.c.b16 %v316, %v314
    %v403 = vpack.c.b16 %v317, %v315
    %v404 = vpack.c.b16 %v320, %v318
    %v405 = vpack.c.b16 %v321, %v319
    %v406 = vpack.c.b16 %v324, %v322
    %v407 = vpack.c.b16 %v325, %v323
    %v408 = vpack.c.b16 %v328, %v326
    %v409 = vpack.c.b16 %v329, %v327
    %v410 = vpack.c.b16 %v332, %v330
    %v411 = vpack.c.b16 %v333, %v331
    %v412 = vpack.c.b16 %v336, %v334
    %v413 = vpack.c.b16 %v337, %v335
    %v414 = vpack.c.b16 %v340, %v338
    %v415 = vpack.c.b16 %v341, %v339
    %v416 = vpack.c.b16 %v344, %v342
    %v417 = vpack.c.b16 %v345, %v343
    %v418 = vpack.c.b16 %v348, %v346
    %v419 = vpack.c.b16 %v349, %v347
    %v420 = vpack.c.b16 %v352, %v350
    %v421 = vpack.c.b16 %v353, %v351
    %v422 = vpack.c.b16 %v356, %v354
    %v423 = vpack.c.b16 %v357, %v355
    %v424 = vpack.c.b16 %v360, %v358
    %v425 = vpack.c.b16 %v361, %v359
    %490 = vmatprep.subr.bf16.mxu0 %v363
    %491 = vmatpush1.bf16.msra.mxu0 %v362
    %492 = vmatprep.subr.bf16.mxu0 %v365
    %493 = vmatpush1.bf16.msra.mxu0 %v364
    %494 = vmatprep.subr.bf16.mxu0 %v367
    %495 = vmatpush1.bf16.msra.mxu0 %v366
    %496 = vmatprep.subr.bf16.mxu0 %v369
    %497 = vmatpush1.bf16.msra.mxu0 %v368
    %498 = vmatprep.subr.bf16.mxu0 %v371
    %499 = vmatpush1.bf16.msra.mxu0 %v370
    %500 = vmatprep.subr.bf16.mxu0 %v373
    %501 = vmatpush1.bf16.msra.mxu0 %v372
    %502 = vmatprep.subr.bf16.mxu0 %v375
    %503 = vmatpush1.bf16.msra.mxu0 %v374
    %504 = vmatprep.subr.bf16.mxu0 %v377
    %505 = vmatpush1.bf16.msra.mxu0 %v376
    %506 = vmatprep.subr.bf16.mxu0 %v379
    %507 = vmatpush1.bf16.msra.mxu0 %v378
    %508 = vmatprep.subr.bf16.mxu0 %v381
    %509 = vmatpush1.bf16.msra.mxu0 %v380
    %510 = vmatprep.subr.bf16.mxu0 %v383
    %511 = vmatpush1.bf16.msra.mxu0 %v382
    %512 = vmatprep.subr.bf16.mxu0 %v385
    %513 = vmatpush1.bf16.msra.mxu0 %v384
    %514 = vmatprep.subr.bf16.mxu0 %v387
    %515 = vmatpush1.bf16.msra.mxu0 %v386
    %516 = vmatprep.subr.bf16.mxu0 %v389
    %517 = vmatpush1.bf16.msra.mxu0 %v388
    %518 = vmatprep.subr.bf16.mxu0 %v391
    %519 = vmatpush1.bf16.msra.mxu0 %v390
    %520 = vmatprep.subr.bf16.mxu0 %v393
    %521 = vmatpush1.bf16.msra.mxu0 %v392
    %522 = vmatprep.mubr.bf16.mxu0 %v163
    %523 = vmatmul.mubr.bf16.gmra.mrb[0].mxu0 %v162
    %v524 = vpop.f32.mrb[0].mxu0
    %v525 = vadd.f32 0.0, %v524
    %v526 = vpop.f32.mrb[0].mxu0
    %v527 = vadd.f32 0.0, %v526
    %v528 = vpop.f32.mrb[0].mxu0
    %v529 = vadd.f32 0.0, %v528
    %v530 = vpop.f32.mrb[0].mxu0
    %v531 = vadd.f32 0.0, %v530
    %532 = vdwg.mxu0
    %533 = vmatprep.subr.bf16.mxu0 %v395
    %534 = vmatpush1.bf16.msra.mxu0 %v394
    %535 = vmatprep.subr.bf16.mxu0 %v397
    %536 = vmatpush1.bf16.msra.mxu0 %v396
    %537 = vmatprep.subr.bf16.mxu0 %v399
    %538 = vmatpush1.bf16.msra.mxu0 %v398
    %539 = vmatprep.subr.bf16.mxu0 %v401
    %540 = vmatpush1.bf16.msra.mxu0 %v400
    %541 = vmatprep.subr.bf16.mxu0 %v403
    %542 = vmatpush1.bf16.msra.mxu0 %v402
    %543 = vmatprep.subr.bf16.mxu0 %v405
    %544 = vmatpush1.bf16.msra.mxu0 %v404
    %545 = vmatprep.subr.bf16.mxu0 %v407
    %546 = vmatpush1.bf16.msra.mxu0 %v406
    %547 = vmatprep.subr.bf16.mxu0 %v409
    %548 = vmatpush1.bf16.msra.mxu0 %v408
    %549 = vmatprep.subr.bf16.mxu0 %v411
    %550 = vmatpush1.bf16.msra.mxu0 %v410
    %551 = vmatprep.subr.bf16.mxu0 %v413
    %552 = vmatpush1.bf16.msra.mxu0 %v412
    %553 = vmatprep.subr.bf16.mxu0 %v415
    %554 = vmatpush1.bf16.msra.mxu0 %v414
    %555 = vmatprep.subr.bf16.mxu0 %v417
    %556 = vmatpush1.bf16.msra.mxu0 %v416
    %557 = vmatprep.subr.bf16.mxu0 %v419
    %558 = vmatpush1.bf16.msra.mxu0 %v418
    %559 = vmatprep.subr.bf16.mxu0 %v421
    %560 = vmatpush1.bf16.msra.mxu0 %v420
    %561 = vmatprep.subr.bf16.mxu0 %v423
    %562 = vmatpush1.bf16.msra.mxu0 %v422
    %563 = vmatprep.subr.bf16.mxu0 %v425
    %564 = vmatpush1.bf16.msra.mxu0 %v424
    %565 = vmatprep.mubr.bf16.mxu0 %v165
    %566 = vmatmul.mubr.bf16.gmra.mrb[0].mxu0 %v164
    %v567 = vpop.f32.mrb[0].mxu0
    %v568 = vadd.f32 %v525, %v567
    %v569 = vpop.f32.mrb[0].mxu0
    %v570 = vadd.f32 %v527, %v569
    %v571 = vpop.f32.mrb[0].mxu0
    %v572 = vadd.f32 %v529, %v571
    %v573 = vpop.f32.mrb[0].mxu0
    %v574 = vadd.f32 %v531, %v573
    %575 = vdwg.mxu0
    %v576 = vld [vmem:[#allocation5] sm:$0xff]
    %v577 = vld [vmem:[#allocation5 + $0x8] sm:$0xff]
    %v578 = vld [vmem:[%s3] sm:$0x3]
    %580 = vset.pattern.permute.xlu0 0
    %581 = vperm.xlu0 %580, %v576
    %v582 = vpop.permute.xlu0 %581
    %585 = vset.pattern.permute.xlu0 0
    %586 = vperm.xlu0 %585, %v577
    %v587 = vpop.permute.xlu0 %586
    %v590 = vlaneseq
    %v591 = vshrl.u32 %v590, 7
    %v592 = vsub.s32 0, %v591
    %v593 = vrot.slane %v578, %v592
    %v594 = vlaneseq
    %v595 = vshrl.u32 %v594, 7
    %v596 = vsub.s32 1, %v595
    %v597 = vrot.slane %v578, %v596
    %v600 = vadd.f32 %v582, %v593
    %v601 = vadd.f32 %v582, %v597
    %v602 = vadd.f32 %v587, %v593
    %v603 = vadd.f32 %v587, %v597
    %v604 = vmul.f32 %v568, 2.0
    %v605 = vmul.f32 %v570, 2.0
    %v606 = vmul.f32 %v572, 2.0
    %v607 = vmul.f32 %v574, 2.0
    %v608 = vsub.f32 %v600, %v604
    %v609 = vsub.f32 %v601, %v605
    %v610 = vsub.f32 %v602, %v606
    %v611 = vsub.f32 %v603, %v607
    %v612 = vmax.f32 %v608, 0.0
    %v613 = vmax.f32 %v609, 0.0
    %v614 = vmax.f32 %v610, 0.0
    %v615 = vmax.f32 %v611, 0.0
    %v616 = vrsqrt.pop %v612
    %v617 = vmul.f32 %v612, %v616
    %vm618 = vcmp.eq.f32.partialorder %v612, inf
    %v619 = vsel %vm618, %v612, %v617
    %vm620 = vcmp.eq.f32.partialorder %v612, 0.0
    %v621 = vand.u32 %v612, 2147483648
    %v622 = vsel %vm620, %v621, %v619
    %v623 = vrsqrt.pop %v613
    %v624 = vmul.f32 %v613, %v623
    %vm625 = vcmp.eq.f32.partialorder %v613, inf
    %v626 = vsel %vm625, %v613, %v624
    %vm627 = vcmp.eq.f32.partialorder %v613, 0.0
    %v628 = vand.u32 %v613, 2147483648
    %v629 = vsel %vm627, %v628, %v626
    %v630 = vrsqrt.pop %v614
    %v631 = vmul.f32 %v614, %v630
    %vm632 = vcmp.eq.f32.partialorder %v614, inf
    %v633 = vsel %vm632, %v614, %v631
    %vm634 = vcmp.eq.f32.partialorder %v614, 0.0
    %v635 = vand.u32 %v614, 2147483648
    %v636 = vsel %vm634, %v635, %v633
    %v637 = vrsqrt.pop %v615
    %v638 = vmul.f32 %v615, %v637
    %vm639 = vcmp.eq.f32.partialorder %v615, inf
    %v640 = vsel %vm639, %v615, %v638
    %vm641 = vcmp.eq.f32.partialorder %v615, 0.0
    %v642 = vand.u32 %v615, 2147483648
    %v643 = vsel %vm641, %v642, %v640
    %v644 = vsub.f32 0.0, %v622
    %v645 = vsub.f32 0.0, %v629
    %v646 = vsub.f32 0.0, %v636
    %v647 = vsub.f32 0.0, %v643
    %v648 = vld [vmem:[%s4] sm:$0x3]
    %v650 = vlaneseq
    %v651 = vshrl.u32 %v650, 7
    %v652 = vsub.s32 0, %v651
    %v653 = vrot.slane %v648, %v652
    %v654 = vlaneseq
    %v655 = vshrl.u32 %v654, 7
    %v656 = vsub.s32 1, %v655
    %v657 = vrot.slane %v648, %v656
    %v660 = vmul.f32 %v644, %v653
    %v661 = vmul.f32 %v645, %v657
    %v662 = vmul.f32 %v646, %v653
    %v663 = vmul.f32 %v647, %v657
    %v664 = vmul.f32 %v660, 1.442695
    %v665 = vpow.pop %v664
    %v666 = vmul.f32 %v661, 1.442695
    %v667 = vpow.pop %v666
    %v668 = vmul.f32 %v662, 1.442695
    %v669 = vpow.pop %v668
    %v670 = vmul.f32 %v663, 1.442695
    %v671 = vpow.pop %v670
    %v672 = vld [vmem:[#allocation8] sm:$0xff]
    %v673 = vld [vmem:[#allocation8 + $0x8] sm:$0xff]
    %v674 = vld [vmem:[#allocation8 + $0x10] sm:$0xff]
    %v675 = vld [vmem:[#allocation8 + $0x18] sm:$0xff]
    %v676 = vld [vmem:[#allocation8 + $0x20] sm:$0xff]
    %v677 = vld [vmem:[#allocation8 + $0x28] sm:$0xff]
    %v678 = vld [vmem:[#allocation8 + $0x30] sm:$0xff]
    %v679 = vld [vmem:[#allocation8 + $0x38] sm:$0xff]
    %v680 = vld [vmem:[#allocation8 + $0x40] sm:$0xff]
    %v681 = vld [vmem:[#allocation8 + $0x48] sm:$0xff]
    %v682 = vld [vmem:[#allocation8 + $0x50] sm:$0xff]
    %v683 = vld [vmem:[#allocation8 + $0x58] sm:$0xff]
    %v684 = vld [vmem:[#allocation8 + $0x60] sm:$0xff]
    %v685 = vld [vmem:[#allocation8 + $0x68] sm:$0xff]
    %v686 = vld [vmem:[#allocation8 + $0x70] sm:$0xff]
    %v687 = vld [vmem:[#allocation8 + $0x78] sm:$0xff]
    %v688 = vld [vmem:[#allocation8 + $0x80] sm:$0xff]
    %v689 = vld [vmem:[#allocation8 + $0x88] sm:$0xff]
    %v690 = vld [vmem:[#allocation8 + $0x90] sm:$0xff]
    %v691 = vld [vmem:[#allocation8 + $0x98] sm:$0xff]
    %v692 = vld [vmem:[#allocation8 + $0xa0] sm:$0xff]
    %v693 = vld [vmem:[#allocation8 + $0xa8] sm:$0xff]
    %v694 = vld [vmem:[#allocation8 + $0xb0] sm:$0xff]
    %v695 = vld [vmem:[#allocation8 + $0xb8] sm:$0xff]
    %v696 = vld [vmem:[#allocation8 + $0xc0] sm:$0xff]
    %v697 = vld [vmem:[#allocation8 + $0xc8] sm:$0xff]
    %v698 = vld [vmem:[#allocation8 + $0xd0] sm:$0xff]
    %v699 = vld [vmem:[#allocation8 + $0xd8] sm:$0xff]
    %v700 = vld [vmem:[#allocation8 + $0xe0] sm:$0xff]
    %v701 = vld [vmem:[#allocation8 + $0xe8] sm:$0xff]
    %v702 = vld [vmem:[#allocation8 + $0xf0] sm:$0xff]
    %v703 = vld [vmem:[#allocation8 + $0xf8] sm:$0xff]
    %v704 = vld [vmem:[%s6] sm:$0x1]
    %v706 = vlaneseq
    %v707 = vshrl.u32 %v706, 7
    %v708 = vsub.s32 0, %v707
    %v709 = vrot.slane %v704, %v708
    %711 = vmatprep.subr.mxu0 0.0
    %712 = vmatpush1.msra.mxu0 %v672
    %713 = vmatprep.subr.mxu0 0.0
    %714 = vmatpush1.msra.mxu0 %v673
    %715 = vmatprep.subr.mxu0 0.0
    %716 = vmatpush1.msra.mxu0 %v674
    %717 = vmatprep.subr.mxu0 0.0
    %718 = vmatpush1.msra.mxu0 %v675
    %719 = vmatprep.subr.mxu0 0.0
    %720 = vmatpush1.msra.mxu0 %v676
    %721 = vmatprep.subr.mxu0 0.0
    %722 = vmatpush1.msra.mxu0 %v677
    %723 = vmatprep.subr.mxu0 0.0
    %724 = vmatpush1.msra.mxu0 %v678
    %725 = vmatprep.subr.mxu0 0.0
    %726 = vmatpush1.msra.mxu0 %v679
    %727 = vmatprep.subr.mxu0 0.0
    %728 = vmatpush1.msra.mxu0 %v680
    %729 = vmatprep.subr.mxu0 0.0
    %730 = vmatpush1.msra.mxu0 %v681
    %731 = vmatprep.subr.mxu0 0.0
    %732 = vmatpush1.msra.mxu0 %v682
    %733 = vmatprep.subr.mxu0 0.0
    %734 = vmatpush1.msra.mxu0 %v683
    %735 = vmatprep.subr.mxu0 0.0
    %736 = vmatpush1.msra.mxu0 %v684
    %737 = vmatprep.subr.mxu0 0.0
    %738 = vmatpush1.msra.mxu0 %v685
    %739 = vmatprep.subr.mxu0 0.0
    %740 = vmatpush1.msra.mxu0 %v686
    %741 = vmatprep.subr.mxu0 0.0
    %742 = vmatpush1.msra.mxu0 %v687
    %743 = vmatprep.subr.mxu0 0.0
    %744 = vmatpush1.msra.mxu0 %v688
    %745 = vmatprep.subr.mxu0 0.0
    %746 = vmatpush1.msra.mxu0 %v689
    %747 = vmatprep.subr.mxu0 0.0
    %748 = vmatpush1.msra.mxu0 %v690
    %749 = vmatprep.subr.mxu0 0.0
    %750 = vmatpush1.msra.mxu0 %v691
    %751 = vmatprep.subr.mxu0 0.0
    %752 = vmatpush1.msra.mxu0 %v692
    %753 = vmatprep.subr.mxu0 0.0
    %754 = vmatpush1.msra.mxu0 %v693
    %755 = vmatprep.subr.mxu0 0.0
    %756 = vmatpush1.msra.mxu0 %v694
    %757 = vmatprep.subr.mxu0 0.0
    %758 = vmatpush1.msra.mxu0 %v695
    %759 = vmatprep.subr.mxu0 0.0
    %760 = vmatpush1.msra.mxu0 %v696
    %761 = vmatprep.subr.mxu0 0.0
    %762 = vmatpush1.msra.mxu0 %v697
    %763 = vmatprep.subr.mxu0 0.0
    %764 = vmatpush1.msra.mxu0 %v698
    %765 = vmatprep.subr.mxu0 0.0
    %766 = vmatpush1.msra.mxu0 %v699
    %767 = vmatprep.subr.mxu0 0.0
    %768 = vmatpush1.msra.mxu0 %v700
    %769 = vmatprep.subr.mxu0 0.0
    %770 = vmatpush1.msra.mxu0 %v701
    %771 = vmatprep.subr.mxu0 0.0
    %772 = vmatpush1.msra.mxu0 %v702
    %773 = vmatprep.subr.mxu0 0.0
    %774 = vmatpush1.msra.mxu0 %v703
    %775 = vmatprep.mubr.f32.mxu0 %v667
    %776 = vmatmul.mubr.f32.gmra.mrb[0].mxu0 %v665
    %v777 = vpop.f32.mrb[0].mxu0
    %v778 = vadd.f32 %v709, %v777
    %v779 = vpop.f32.mrb[0].mxu0
    %780 = vmatprep.mubr.f32.mxu0 %v671
    %781 = vmatmul.mubr.f32.gmra.mrb[0].mxu0 %v669
    %v782 = vpop.f32.mrb[0].mxu0
    %v783 = vadd.f32 %v709, %v782
    %v784 = vpop.f32.mrb[0].mxu0
    %785 = vdwg.mxu0
    %786 = vst [vmem:[#allocation10] sm:$0xff] %v778
    %787 = vst [vmem:[#allocation10 + $0x8] sm:$0xff] %v783
    // Predicated region
    $region46: #{tpu_custom_call.1} parent=1 // pred_check
      _
    $region47: #{tpu_custom_call.1} parent=1 // pred_check_branch
      %789 = sbr.rel (0) target = $region49
    $region48: #{tpu_custom_call.1} parent=1 // pred_region
      %s791 = ssub.s32 256, 256
      %792 = vsyncadd [#allocation4], %s791
      %s793 = sshll.u32 [#allocation10], 4
      %s794 = int_to_ptr.vmem [resolvable:$true] %s793
      %799 = dma.vmem_to_hbm [thread:$0]  %s794, 256, %s7, [#allocation4], 128, 128, 8
    $region49: #{tpu_custom_call.1} parent=1 // pred_fallthru
      _
    // Predicated region
    $region50: #{tpu_custom_call.1} parent=1 // pred_check
      _
    $region51: #{tpu_custom_call.1} parent=1 // pred_check_branch
      %801 = sbr.rel (0) target = $region53
    $region52: #{tpu_custom_call.1} parent=1 // pred_region
      %802 = dma.done [#allocation4], 256
    $region53: #{tpu_custom_call.1} parent=1 // pred_fallthru
      _
    %803 = vsyncpa [#allocation3], 1
    %804 = vsyncpa [#allocation6], 1
    %805 = vsyncpa [#allocation9], 1
    %806 = vsyncpa [#allocation4], 1

// kernel: tpu_custom_call.1
$region0: #{tpu_custom_call.1}
  #allocation0 [shape = 'u32[]', space=smem, size = 0x4, offset = 0x4, fixed_abs, tag = 'smem constant byte address 0x4 - core index']
  #allocation1 [shape = 'u32[144,128]{1,0:T(1,128)}', space=vmem, size = 0x12000, scoped, tag = 'internal scratch']
  %s0 = inlined_call_operand.hbm [shape: bf16[16,512], index: 0, kind: input, shape index: {}]
  %s1 = inlined_call_operand.hbm [shape: f32[16,128], index: 1, kind: input, shape index: {}]
  %s2 = inlined_call_operand.hbm [shape: bf16[512,256], index: 2, kind: input, shape index: {}]
  %s3 = inlined_call_operand.vmem [shape: f32[1,256], index: 3, kind: input, shape index: {}]
  %s4 = inlined_call_operand.vmem [shape: f32[1,256], index: 4, kind: input, shape index: {}]
  %s5 = inlined_call_operand.hbm [shape: f32[256,128], index: 5, kind: input, shape index: {}]
  %s6 = inlined_call_operand.vmem [shape: f32[1,128], index: 6, kind: input, shape index: {}]
  %s7 = inlined_call_operand.hbm [shape: f32[16,128], index: 7, kind: output, shape index: {}]
  %s8 = sld [smem:[#allocation0]]
  $region54: #{tpu_custom_call.1} parent=0
    _
  %s10 = ssub.s32 1, %s8
  %s11 = scalar_select 0, %s10, %s8
  $region1: #{tpu_custom_call.1} parent=0
    #allocation2 [shape = 'u8[16384]{0}', space=vmem, size = 0x4000, scoped, tag = 'input window, operand 0, single buffered']
    #allocation3 [shape = 's32[1]{0}', space=sflag, size = 0x4, scoped, tag = 'scoped memory for tpu_custom_call.1']
    #allocation4 [shape = 's32[1]{0}', space=sflag, size = 0x4, scoped, tag = 'scoped memory for tpu_custom_call.1']
    #allocation5 [shape = 'u8[8192]{0}', space=vmem, size = 0x2000, scoped, tag = 'input window, operand 1, single buffered']
    #allocation6 [shape = 's32[1]{0}', space=sflag, size = 0x4, scoped, tag = 'scoped memory for tpu_custom_call.1']
    #allocation7 [shape = 'u8[262144]{0}', space=vmem, size = 0x40000, scoped, tag = 'input window, operand 2, single buffered']
    #allocation8 [shape = 'u8[131072]{0}', space=vmem, size = 0x20000, scoped, tag = 'input window, operand 5, single buffered']
    #allocation9 [shape = 's32[1]{0}', space=sflag, size = 0x4, scoped, tag = 'scoped memory for tpu_custom_call.1']
    #allocation10 [shape = 'u8[8192]{0}', space=vmem, size = 0x2000, scoped, tag = 'output window, operand 0, single buffered']
    %12 = vsyncpa [#allocation3], 0
    %13 = vsyncpa [#allocation6], 0
    %14 = vsyncpa [#allocation9], 0
    %15 = vsyncpa [#allocation4], 0
    // Predicated region
    $region2: #{tpu_custom_call.1} parent=1 // pred_check
      _
    $region3: #{tpu_custom_call.1} parent=1 // pred_check_branch
      %17 = sbr.rel (0) target = $region5
    $region4: #{tpu_custom_call.1} parent=1 // pred_region
      %s19 = ssub.s32 512, 512
      %20 = vsyncadd [#allocation3], %s19
      %s21 = sshll.u32 [#allocation2], 4
      %s22 = int_to_ptr.vmem [resolvable:$true] %s21
      %27 = dma.hbm_to_vmem [thread:$0]  %s0, 512, %s22, [#allocation3], 256, 256, 16
    $region5: #{tpu_custom_call.1} parent=1 // pred_fallthru
      _
    // Predicated region
    $region6: #{tpu_custom_call.1} parent=1 // pred_check
      _
    $region7: #{tpu_custom_call.1} parent=1 // pred_check_branch
      %29 = sbr.rel (0) target = $region9
    $region8: #{tpu_custom_call.1} parent=1 // pred_region
      %s31 = ssub.s32 256, 256
      %32 = vsyncadd [#allocation6], %s31
      %s33 = sshll.u32 [#allocation5], 4
      %s34 = int_to_ptr.vmem [resolvable:$true] %s33
      %39 = dma.hbm_to_vmem [thread:$0]  %s1, 256, %s34, [#allocation6], 128, 128, 8
    $region9: #{tpu_custom_call.1} parent=1 // pred_fallthru
      _
    // Predicated region
    $region10: #{tpu_custom_call.1} parent=1 // pred_check
      _
    $region11: #{tpu_custom_call.1} parent=1 // pred_check_branch
      %41 = sbr.rel (0) target = $region13
    $region12: #{tpu_custom_call.1} parent=1 // pred_region
      %s43 = ssub.s32 8192, 8192
      %44 = vsyncadd [#allocation6], %s43
      %s45 = sshll.u32 [#allocation7], 4
      %s46 = int_to_ptr.vmem [resolvable:$true] %s45
      %51 = dma.hbm_to_vmem [thread:$0]  %s2, 8192, %s46, [#allocation6], 128, 128, 8
    $region13: #{tpu_custom_call.1} parent=1 // pred_fallthru
      _
    // Predicated region
    $region14: #{tpu_custom_call.1} parent=1 // pred_check
      _
    $region15: #{tpu_custom_call.1} parent=1 // pred_check_branch
      %53 = sbr.rel (0) target = $region17
    $region16: #{tpu_custom_call.1} parent=1 // pred_region
      _
    $region17: #{tpu_custom_call.1} parent=1 // pred_fallthru
      _
    // Predicated region
    $region18: #{tpu_custom_call.1} parent=1 // pred_check
      _
    $region19: #{tpu_custom_call.1} parent=1 // pred_check_branch
      %55 = sbr.rel (0) target = $region21
    $region20: #{tpu_custom_call.1} parent=1 // pred_region
      _
    $region21: #{tpu_custom_call.1} parent=1 // pred_fallthru
      _
    // Predicated region
    $region22: #{tpu_custom_call.1} parent=1 // pred_check
      _
    $region23: #{tpu_custom_call.1} parent=1 // pred_check_branch
      %57 = sbr.rel (0) target = $region25
    $region24: #{tpu_custom_call.1} parent=1 // pred_region
      %s59 = ssub.s32 4096, 4096
      %60 = vsyncadd [#allocation9], %s59
      %s61 = sshll.u32 [#allocation8], 4
      %s62 = int_to_ptr.vmem [resolvable:$true] %s61
      %67 = dma.hbm_to_vmem [thread:$0]  %s5, 4096, %s62, [#allocation9], 128, 128, 8
    $region25: #{tpu_custom_call.1} parent=1 // pred_fallthru
      _
    // Predicated region
    $region26: #{tpu_custom_call.1} parent=1 // pred_check
      _
    $region27: #{tpu_custom_call.1} parent=1 // pred_check_branch
      %69 = sbr.rel (0) target = $region29
    $region28: #{tpu_custom_call.1} parent=1 // pred_region
      _
    $region29: #{tpu_custom_call.1} parent=1 // pred_fallthru
      _
    // Predicated region
    $region30: #{tpu_custom_call.1} parent=1 // pred_check
      _
    $region31: #{tpu_custom_call.1} parent=1 // pred_check_branch
      %71 = sbr.rel (0) target = $region33
    $region32: #{tpu_custom_call.1} parent=1 // pred_region
      %72 = dma.done [#allocation3], 512
    $region33: #{tpu_custom_call.1} parent=1 // pred_fallthru
      _
    // Predicated region
    $region34: #{tpu_custom_call.1} parent=1 // pred_check
      _
    $region35: #{tpu_custom_call.1} parent=1 // pred_check_branch
      %74 = sbr.rel (0) target = $region37
    $region36: #{tpu_custom_call.1} parent=1 // pred_region
      %75 = dma.done [#allocation6], 256
    $region37: #{tpu_custom_call.1} parent=1 // pred_fallthru
      _
    // Predicated region
    $region38: #{tpu_custom_call.1} parent=1 // pred_check
      _
    $region39: #{tpu_custom_call.1} parent=1 // pred_check_branch
      %77 = sbr.rel (0) target = $region41
    $region40: #{tpu_custom_call.1} parent=1 // pred_region
      %78 = dma.done [#allocation6], 8192
    $region41: #{tpu_custom_call.1} parent=1 // pred_fallthru
      _
    // Predicated region
    $region42: #{tpu_custom_call.1} parent=1 // pred_check
      _
    $region43: #{tpu_custom_call.1} parent=1 // pred_check_branch
      %80 = sbr.rel (0) target = $region45
    $region44: #{tpu_custom_call.1} parent=1 // pred_region
      %81 = dma.done [#allocation9], 4096
    $region45: #{tpu_custom_call.1} parent=1 // pred_fallthru
      _
    %v82 = vld [vmem:[#allocation2] sm:$0xff]
    %v83 = vld [vmem:[#allocation2 + $0x8] sm:$0xff]
    %v84 = vld [vmem:[#allocation2 + $0x10] sm:$0xff]
    %v85 = vld [vmem:[#allocation2 + $0x18] sm:$0xff]
    %v86 = vld [vmem:[#allocation7] sm:$0xff]
    %v87 = vld [vmem:[#allocation7 + $0x8] sm:$0xff]
    %v88 = vld [vmem:[#allocation7 + $0x10] sm:$0xff]
    %v89 = vld [vmem:[#allocation7 + $0x18] sm:$0xff]
    %v90 = vld [vmem:[#allocation7 + $0x20] sm:$0xff]
    %v91 = vld [vmem:[#allocation7 + $0x28] sm:$0xff]
    %v92 = vld [vmem:[#allocation7 + $0x30] sm:$0xff]
    %v93 = vld [vmem:[#allocation7 + $0x38] sm:$0xff]
    %v94 = vld [vmem:[#allocation7 + $0x40] sm:$0xff]
    %v95 = vld [vmem:[#allocation7 + $0x48] sm:$0xff]
    %v96 = vld [vmem:[#allocation7 + $0x50] sm:$0xff]
    %v97 = vld [vmem:[#allocation7 + $0x58] sm:$0xff]
    %v98 = vld [vmem:[#allocation7 + $0x60] sm:$0xff]
    %v99 = vld [vmem:[#allocation7 + $0x68] sm:$0xff]
    %v100 = vld [vmem:[#allocation7 + $0x70] sm:$0xff]
    %v101 = vld [vmem:[#allocation7 + $0x78] sm:$0xff]
    %v102 = vld [vmem:[#allocation7 + $0x80] sm:$0xff]
    %v103 = vld [vmem:[#allocation7 + $0x88] sm:$0xff]
    %v104 = vld [vmem:[#allocation7 + $0x90] sm:$0xff]
    %v105 = vld [vmem:[#allocation7 + $0x98] sm:$0xff]
    %v106 = vld [vmem:[#allocation7 + $0xa0] sm:$0xff]
    %v107 = vld [vmem:[#allocation7 + $0xa8] sm:$0xff]
    %v108 = vld [vmem:[#allocation7 + $0xb0] sm:$0xff]
    %v109 = vld [vmem:[#allocation7 + $0xb8] sm:$0xff]
    %v110 = vld [vmem:[#allocation7 + $0xc0] sm:$0xff]
    %v111 = vld [vmem:[#allocation7 + $0xc8] sm:$0xff]
    %v112 = vld [vmem:[#allocation7 + $0xd0] sm:$0xff]
    %v113 = vld [vmem:[#allocation7 + $0xd8] sm:$0xff]
    %v114 = vld [vmem:[#allocation7 + $0xe0] sm:$0xff]
    %v115 = vld [vmem:[#allocation7 + $0xe8] sm:$0xff]
    %v116 = vld [vmem:[#allocation7 + $0xf0] sm:$0xff]
    %v117 = vld [vmem:[#allocation7 + $0xf8] sm:$0xff]
    %v118 = vld [vmem:[#allocation7 + $0x100] sm:$0xff]
    %v119 = vld [vmem:[#allocation7 + $0x108] sm:$0xff]
    %v120 = vld [vmem:[#allocation7 + $0x110] sm:$0xff]
    %v121 = vld [vmem:[#allocation7 + $0x118] sm:$0xff]
    %v122 = vld [vmem:[#allocation7 + $0x120] sm:$0xff]
    %v123 = vld [vmem:[#allocation7 + $0x128] sm:$0xff]
    %v124 = vld [vmem:[#allocation7 + $0x130] sm:$0xff]
    %v125 = vld [vmem:[#allocation7 + $0x138] sm:$0xff]
    %v126 = vld [vmem:[#allocation7 + $0x140] sm:$0xff]
    %v127 = vld [vmem:[#allocation7 + $0x148] sm:$0xff]
    %v128 = vld [vmem:[#allocation7 + $0x150] sm:$0xff]
    %v129 = vld [vmem:[#allocation7 + $0x158] sm:$0xff]
    %v130 = vld [vmem:[#allocation7 + $0x160] sm:$0xff]
    %v131 = vld [vmem:[#allocation7 + $0x168] sm:$0xff]
    %v132 = vld [vmem:[#allocation7 + $0x170] sm:$0xff]
    %v133 = vld [vmem:[#allocation7 + $0x178] sm:$0xff]
    %v134 = vld [vmem:[#allocation7 + $0x180] sm:$0xff]
    %v135 = vld [vmem:[#allocation7 + $0x188] sm:$0xff]
    %v136 = vld [vmem:[#allocation7 + $0x190] sm:$0xff]
    %v137 = vld [vmem:[#allocation7 + $0x198] sm:$0xff]
    %v138 = vld [vmem:[#allocation7 + $0x1a0] sm:$0xff]
    %v139 = vld [vmem:[#allocation7 + $0x1a8] sm:$0xff]
    %v140 = vld [vmem:[#allocation7 + $0x1b0] sm:$0xff]
    %v141 = vld [vmem:[#allocation7 + $0x1b8] sm:$0xff]
    %v142 = vld [vmem:[#allocation7 + $0x1c0] sm:$0xff]
    %v143 = vld [vmem:[#allocation7 + $0x1c8] sm:$0xff]
    %v144 = vld [vmem:[#allocation7 + $0x1d0] sm:$0xff]
    %v145 = vld [vmem:[#allocation7 + $0x1d8] sm:$0xff]
    %v146 = vld [vmem:[#allocation7 + $0x1e0] sm:$0xff]
    %v147 = vld [vmem:[#allocation7 + $0x1e8] sm:$0xff]
    %v148 = vld [vmem:[#allocation7 + $0x1f0] sm:$0xff]
    %v149 = vld [vmem:[#allocation7 + $0x1f8] sm:$0xff]
    %v154 = vunpack.c.l.b16 %v82
    %v155 = vunpack.c.h.b16 %v82
    %v156 = vunpack.c.l.b16 %v83
    %v157 = vunpack.c.h.b16 %v83
    %v158 = vunpack.c.l.b16 %v84
    %v159 = vunpack.c.h.b16 %v84
    %v160 = vunpack.c.l.b16 %v85
    %v161 = vunpack.c.h.b16 %v85
    %v162 = vpack.c.b16 %v158, %v154
    %v163 = vpack.c.b16 %v159, %v155
    %v164 = vpack.c.b16 %v160, %v156
    %v165 = vpack.c.b16 %v161, %v157
    %v234 = vunpack.c.l.b16 %v86
    %v235 = vunpack.c.h.b16 %v86
    %v236 = vunpack.c.l.b16 %v87
    %v237 = vunpack.c.h.b16 %v87
    %v238 = vunpack.c.l.b16 %v88
    %v239 = vunpack.c.h.b16 %v88
    %v240 = vunpack.c.l.b16 %v89
    %v241 = vunpack.c.h.b16 %v89
    %v242 = vunpack.c.l.b16 %v90
    %v243 = vunpack.c.h.b16 %v90
    %v244 = vunpack.c.l.b16 %v91
    %v245 = vunpack.c.h.b16 %v91
    %v246 = vunpack.c.l.b16 %v92
    %v247 = vunpack.c.h.b16 %v92
    %v248 = vunpack.c.l.b16 %v93
    %v249 = vunpack.c.h.b16 %v93
    %v250 = vunpack.c.l.b16 %v94
    %v251 = vunpack.c.h.b16 %v94
    %v252 = vunpack.c.l.b16 %v95
    %v253 = vunpack.c.h.b16 %v95
    %v254 = vunpack.c.l.b16 %v96
    %v255 = vunpack.c.h.b16 %v96
    %v256 = vunpack.c.l.b16 %v97
    %v257 = vunpack.c.h.b16 %v97
    %v258 = vunpack.c.l.b16 %v98
    %v259 = vunpack.c.h.b16 %v98
    %v260 = vunpack.c.l.b16 %v99
    %v261 = vunpack.c.h.b16 %v99
    %v262 = vunpack.c.l.b16 %v100
    %v263 = vunpack.c.h.b16 %v100
    %v264 = vunpack.c.l.b16 %v101
    %v265 = vunpack.c.h.b16 %v101
    %v266 = vunpack.c.l.b16 %v102
    %v267 = vunpack.c.h.b16 %v102
    %v268 = vunpack.c.l.b16 %v103
    %v269 = vunpack.c.h.b16 %v103
    %v270 = vunpack.c.l.b16 %v104
    %v271 = vunpack.c.h.b16 %v104
    %v272 = vunpack.c.l.b16 %v105
    %v273 = vunpack.c.h.b16 %v105
    %v274 = vunpack.c.l.b16 %v106
    %v275 = vunpack.c.h.b16 %v106
    %v276 = vunpack.c.l.b16 %v107
    %v277 = vunpack.c.h.b16 %v107
    %v278 = vunpack.c.l.b16 %v108
    %v279 = vunpack.c.h.b16 %v108
    %v280 = vunpack.c.l.b16 %v109
    %v281 = vunpack.c.h.b16 %v109
    %v282 = vunpack.c.l.b16 %v110
    %v283 = vunpack.c.h.b16 %v110
    %v284 = vunpack.c.l.b16 %v111
    %v285 = vunpack.c.h.b16 %v111
    %v286 = vunpack.c.l.b16 %v112
    %v287 = vunpack.c.h.b16 %v112
    %v288 = vunpack.c.l.b16 %v113
    %v289 = vunpack.c.h.b16 %v113
    %v290 = vunpack.c.l.b16 %v114
    %v291 = vunpack.c.h.b16 %v114
    %v292 = vunpack.c.l.b16 %v115
    %v293 = vunpack.c.h.b16 %v115
    %v294 = vunpack.c.l.b16 %v116
    %v295 = vunpack.c.h.b16 %v116
    %v296 = vunpack.c.l.b16 %v117
    %v297 = vunpack.c.h.b16 %v117
    %v298 = vunpack.c.l.b16 %v118
    %v299 = vunpack.c.h.b16 %v118
    %v300 = vunpack.c.l.b16 %v119
    %v301 = vunpack.c.h.b16 %v119
    %v302 = vunpack.c.l.b16 %v120
    %v303 = vunpack.c.h.b16 %v120
    %v304 = vunpack.c.l.b16 %v121
    %v305 = vunpack.c.h.b16 %v121
    %v306 = vunpack.c.l.b16 %v122
    %v307 = vunpack.c.h.b16 %v122
    %v308 = vunpack.c.l.b16 %v123
    %v309 = vunpack.c.h.b16 %v123
    %v310 = vunpack.c.l.b16 %v124
    %v311 = vunpack.c.h.b16 %v124
    %v312 = vunpack.c.l.b16 %v125
    %v313 = vunpack.c.h.b16 %v125
    %v314 = vunpack.c.l.b16 %v126
    %v315 = vunpack.c.h.b16 %v126
    %v316 = vunpack.c.l.b16 %v127
    %v317 = vunpack.c.h.b16 %v127
    %v318 = vunpack.c.l.b16 %v128
    %v319 = vunpack.c.h.b16 %v128
    %v320 = vunpack.c.l.b16 %v129
    %v321 = vunpack.c.h.b16 %v129
    %v322 = vunpack.c.l.b16 %v130
    %v323 = vunpack.c.h.b16 %v130
    %v324 = vunpack.c.l.b16 %v131
    %v325 = vunpack.c.h.b16 %v131
    %v326 = vunpack.c.l.b16 %v132
    %v327 = vunpack.c.h.b16 %v132
    %v328 = vunpack.c.l.b16 %v133
    %v329 = vunpack.c.h.b16 %v133
    %v330 = vunpack.c.l.b16 %v134
    %v331 = vunpack.c.h.b16 %v134
    %v332 = vunpack.c.l.b16 %v135
    %v333 = vunpack.c.h.b16 %v135
    %v334 = vunpack.c.l.b16 %v136
    %v335 = vunpack.c.h.b16 %v136
    %v336 = vunpack.c.l.b16 %v137
    %v337 = vunpack.c.h.b16 %v137
    %v338 = vunpack.c.l.b16 %v138
    %v339 = vunpack.c.h.b16 %v138
    %v340 = vunpack.c.l.b16 %v139
    %v341 = vunpack.c.h.b16 %v139
    %v342 = vunpack.c.l.b16 %v140
    %v343 = vunpack.c.h.b16 %v140
    %v344 = vunpack.c.l.b16 %v141
    %v345 = vunpack.c.h.b16 %v141
    %v346 = vunpack.c.l.b16 %v142
    %v347 = vunpack.c.h.b16 %v142
    %v348 = vunpack.c.l.b16 %v143
    %v349 = vunpack.c.h.b16 %v143
    %v350 = vunpack.c.l.b16 %v144
    %v351 = vunpack.c.h.b16 %v144
    %v352 = vunpack.c.l.b16 %v145
    %v353 = vunpack.c.h.b16 %v145
    %v354 = vunpack.c.l.b16 %v146
    %v355 = vunpack.c.h.b16 %v146
    %v356 = vunpack.c.l.b16 %v147
    %v357 = vunpack.c.h.b16 %v147
    %v358 = vunpack.c.l.b16 %v148
    %v359 = vunpack.c.h.b16 %v148
    %v360 = vunpack.c.l.b16 %v149
    %v361 = vunpack.c.h.b16 %v149
    %v362 = vpack.c.b16 %v236, %v234
    %v363 = vpack.c.b16 %v237, %v235
    %v364 = vpack.c.b16 %v240, %v238
    %v365 = vpack.c.b16 %v241, %v239
    %v366 = vpack.c.b16 %v244, %v242
    %v367 = vpack.c.b16 %v245, %v243
    %v368 = vpack.c.b16 %v248, %v246
    %v369 = vpack.c.b16 %v249, %v247
    %v370 = vpack.c.b16 %v252, %v250
    %v371 = vpack.c.b16 %v253, %v251
    %v372 = vpack.c.b16 %v256, %v254
    %v373 = vpack.c.b16 %v257, %v255
    %v374 = vpack.c.b16 %v260, %v258
    %v375 = vpack.c.b16 %v261, %v259
    %v376 = vpack.c.b16 %v264, %v262
    %v377 = vpack.c.b16 %v265, %v263
    %v378 = vpack.c.b16 %v268, %v266
    %v379 = vpack.c.b16 %v269, %v267
    %v380 = vpack.c.b16 %v272, %v270
    %v381 = vpack.c.b16 %v273, %v271
    %v382 = vpack.c.b16 %v276, %v274
    %v383 = vpack.c.b16 %v277, %v275
    %v384 = vpack.c.b16 %v280, %v278
    %v385 = vpack.c.b16 %v281, %v279
    %v386 = vpack.c.b16 %v284, %v282
    %v387 = vpack.c.b16 %v285, %v283
    %v388 = vpack.c.b16 %v288, %v286
    %v389 = vpack.c.b16 %v289, %v287
    %v390 = vpack.c.b16 %v292, %v290
    %v391 = vpack.c.b16 %v293, %v291
    %v392 = vpack.c.b16 %v296, %v294
    %v393 = vpack.c.b16 %v297, %v295
    %v394 = vpack.c.b16 %v300, %v298
    %v395 = vpack.c.b16 %v301, %v299
    %v396 = vpack.c.b16 %v304, %v302
    %v397 = vpack.c.b16 %v305, %v303
    %v398 = vpack.c.b16 %v308, %v306
    %v399 = vpack.c.b16 %v309, %v307
    %v400 = vpack.c.b16 %v312, %v310
    %v401 = vpack.c.b16 %v313, %v311
    %v402 = vpack.c.b16 %v316, %v314
    %v403 = vpack.c.b16 %v317, %v315
    %v404 = vpack.c.b16 %v320, %v318
    %v405 = vpack.c.b16 %v321, %v319
    %v406 = vpack.c.b16 %v324, %v322
    %v407 = vpack.c.b16 %v325, %v323
    %v408 = vpack.c.b16 %v328, %v326
    %v409 = vpack.c.b16 %v329, %v327
    %v410 = vpack.c.b16 %v332, %v330
    %v411 = vpack.c.b16 %v333, %v331
    %v412 = vpack.c.b16 %v336, %v334
    %v413 = vpack.c.b16 %v337, %v335
    %v414 = vpack.c.b16 %v340, %v338
    %v415 = vpack.c.b16 %v341, %v339
    %v416 = vpack.c.b16 %v344, %v342
    %v417 = vpack.c.b16 %v345, %v343
    %v418 = vpack.c.b16 %v348, %v346
    %v419 = vpack.c.b16 %v349, %v347
    %v420 = vpack.c.b16 %v352, %v350
    %v421 = vpack.c.b16 %v353, %v351
    %v422 = vpack.c.b16 %v356, %v354
    %v423 = vpack.c.b16 %v357, %v355
    %v424 = vpack.c.b16 %v360, %v358
    %v425 = vpack.c.b16 %v361, %v359
    %490 = vmatprep.subr.bf16.mxu0 %v363
    %491 = vmatpush1.bf16.msra.mxu0 %v362
    %492 = vmatprep.subr.bf16.mxu0 %v365
    %493 = vmatpush1.bf16.msra.mxu0 %v364
    %494 = vmatprep.subr.bf16.mxu0 %v367
    %495 = vmatpush1.bf16.msra.mxu0 %v366
    %496 = vmatprep.subr.bf16.mxu0 %v369
    %497 = vmatpush1.bf16.msra.mxu0 %v368
    %498 = vmatprep.subr.bf16.mxu0 %v371
    %499 = vmatpush1.bf16.msra.mxu0 %v370
    %500 = vmatprep.subr.bf16.mxu0 %v373
    %501 = vmatpush1.bf16.msra.mxu0 %v372
    %502 = vmatprep.subr.bf16.mxu0 %v375
    %503 = vmatpush1.bf16.msra.mxu0 %v374
    %504 = vmatprep.subr.bf16.mxu0 %v377
    %505 = vmatpush1.bf16.msra.mxu0 %v376
    %506 = vmatprep.subr.bf16.mxu0 %v379
    %507 = vmatpush1.bf16.msra.mxu0 %v378
    %508 = vmatprep.subr.bf16.mxu0 %v381
    %509 = vmatpush1.bf16.msra.mxu0 %v380
    %510 = vmatprep.subr.bf16.mxu0 %v383
    %511 = vmatpush1.bf16.msra.mxu0 %v382
    %512 = vmatprep.subr.bf16.mxu0 %v385
    %513 = vmatpush1.bf16.msra.mxu0 %v384
    %514 = vmatprep.subr.bf16.mxu0 %v387
    %515 = vmatpush1.bf16.msra.mxu0 %v386
    %516 = vmatprep.subr.bf16.mxu0 %v389
    %517 = vmatpush1.bf16.msra.mxu0 %v388
    %518 = vmatprep.subr.bf16.mxu0 %v391
    %519 = vmatpush1.bf16.msra.mxu0 %v390
    %520 = vmatprep.subr.bf16.mxu0 %v393
    %521 = vmatpush1.bf16.msra.mxu0 %v392
    %522 = vmatprep.mubr.bf16.mxu0 %v163
    %523 = vmatmul.mubr.bf16.gmra.mrb[0].mxu0 %v162
    %v524 = vpop.f32.mrb[0].mxu0
    %v525 = vadd.f32 0.0, %v524
    %v526 = vpop.f32.mrb[0].mxu0
    %v527 = vadd.f32 0.0, %v526
    %v528 = vpop.f32.mrb[0].mxu0
    %v529 = vadd.f32 0.0, %v528
    %v530 = vpop.f32.mrb[0].mxu0
    %v531 = vadd.f32 0.0, %v530
    %532 = vdwg.mxu0
    %533 = vmatprep.subr.bf16.mxu0 %v395
    %534 = vmatpush1.bf16.msra.mxu0 %v394
    %535 = vmatprep.subr.bf16.mxu0 %v397
    %536 = vmatpush1.bf16.msra.mxu0 %v396
    %537 = vmatprep.subr.bf16.mxu0 %v399
    %538 = vmatpush1.bf16.msra.mxu0 %v398
    %539 = vmatprep.subr.bf16.mxu0 %v401
    %540 = vmatpush1.bf16.msra.mxu0 %v400
    %541 = vmatprep.subr.bf16.mxu0 %v403
    %542 = vmatpush1.bf16.msra.mxu0 %v402
    %543 = vmatprep.subr.bf16.mxu0 %v405
    %544 = vmatpush1.bf16.msra.mxu0 %v404
    %545 = vmatprep.subr.bf16.mxu0 %v407
    %546 = vmatpush1.bf16.msra.mxu0 %v406
    %547 = vmatprep.subr.bf16.mxu0 %v409
    %548 = vmatpush1.bf16.msra.mxu0 %v408
    %549 = vmatprep.subr.bf16.mxu0 %v411
    %550 = vmatpush1.bf16.msra.mxu0 %v410
    %551 = vmatprep.subr.bf16.mxu0 %v413
    %552 = vmatpush1.bf16.msra.mxu0 %v412
    %553 = vmatprep.subr.bf16.mxu0 %v415
    %554 = vmatpush1.bf16.msra.mxu0 %v414
    %555 = vmatprep.subr.bf16.mxu0 %v417
    %556 = vmatpush1.bf16.msra.mxu0 %v416
    %557 = vmatprep.subr.bf16.mxu0 %v419
    %558 = vmatpush1.bf16.msra.mxu0 %v418
    %559 = vmatprep.subr.bf16.mxu0 %v421
    %560 = vmatpush1.bf16.msra.mxu0 %v420
    %561 = vmatprep.subr.bf16.mxu0 %v423
    %562 = vmatpush1.bf16.msra.mxu0 %v422
    %563 = vmatprep.subr.bf16.mxu0 %v425
    %564 = vmatpush1.bf16.msra.mxu0 %v424
    %565 = vmatprep.mubr.bf16.mxu0 %v165
    %566 = vmatmul.mubr.bf16.gmra.mrb[0].mxu0 %v164
    %v567 = vpop.f32.mrb[0].mxu0
    %v568 = vadd.f32 %v525, %v567
    %v569 = vpop.f32.mrb[0].mxu0
    %v570 = vadd.f32 %v527, %v569
    %v571 = vpop.f32.mrb[0].mxu0
    %v572 = vadd.f32 %v529, %v571
    %v573 = vpop.f32.mrb[0].mxu0
    %v574 = vadd.f32 %v531, %v573
    %575 = vdwg.mxu0
    %v576 = vld [vmem:[#allocation5] sm:$0xff]
    %v577 = vld [vmem:[#allocation5 + $0x8] sm:$0xff]
    %v578 = vld [vmem:[%s3] sm:$0x3]
    %580 = vset.pattern.permute.xlu0 0
    %581 = vperm.xlu0 %580, %v576
    %v582 = vpop.permute.xlu0 %581
    %585 = vset.pattern.permute.xlu0 0
    %586 = vperm.xlu0 %585, %v577
    %v587 = vpop.permute.xlu0 %586
    %v590 = vlaneseq
    %v591 = vshrl.u32 %v590, 7
    %v592 = vsub.s32 0, %v591
    %v593 = vrot.slane %v578, %v592
    %v594 = vlaneseq
    %v595 = vshrl.u32 %v594, 7
    %v596 = vsub.s32 1, %v595
    %v597 = vrot.slane %v578, %v596
    %v600 = vadd.f32 %v582, %v593
    %v601 = vadd.f32 %v582, %v597
    %v602 = vadd.f32 %v587, %v593
    %v603 = vadd.f32 %v587, %v597
    %v604 = vmul.f32 %v568, 2.0
    %v605 = vmul.f32 %v570, 2.0
    %v606 = vmul.f32 %v572, 2.0
    %v607 = vmul.f32 %v574, 2.0
    %v608 = vsub.f32 %v600, %v604
    %v609 = vsub.f32 %v601, %v605
    %v610 = vsub.f32 %v602, %v606
    %v611 = vsub.f32 %v603, %v607
    %v612 = vmax.f32 %v608, 0.0
    %v613 = vmax.f32 %v609, 0.0
    %v614 = vmax.f32 %v610, 0.0
    %v615 = vmax.f32 %v611, 0.0
    %v616 = vrsqrt.pop %v612
    %v617 = vmul.f32 %v612, %v616
    %vm618 = vcmp.eq.f32.partialorder %v612, inf
    %v619 = vsel %vm618, %v612, %v617
    %vm620 = vcmp.eq.f32.partialorder %v612, 0.0
    %v621 = vand.u32 %v612, 2147483648
    %v622 = vsel %vm620, %v621, %v619
    %v623 = vrsqrt.pop %v613
    %v624 = vmul.f32 %v613, %v623
    %vm625 = vcmp.eq.f32.partialorder %v613, inf
    %v626 = vsel %vm625, %v613, %v624
    %vm627 = vcmp.eq.f32.partialorder %v613, 0.0
    %v628 = vand.u32 %v613, 2147483648
    %v629 = vsel %vm627, %v628, %v626
    %v630 = vrsqrt.pop %v614
    %v631 = vmul.f32 %v614, %v630
    %vm632 = vcmp.eq.f32.partialorder %v614, inf
    %v633 = vsel %vm632, %v614, %v631
    %vm634 = vcmp.eq.f32.partialorder %v614, 0.0
    %v635 = vand.u32 %v614, 2147483648
    %v636 = vsel %vm634, %v635, %v633
    %v637 = vrsqrt.pop %v615
    %v638 = vmul.f32 %v615, %v637
    %vm639 = vcmp.eq.f32.partialorder %v615, inf
    %v640 = vsel %vm639, %v615, %v638
    %vm641 = vcmp.eq.f32.partialorder %v615, 0.0
    %v642 = vand.u32 %v615, 2147483648
    %v643 = vsel %vm641, %v642, %v640
    %v644 = vsub.f32 0.0, %v622
    %v645 = vsub.f32 0.0, %v629
    %v646 = vsub.f32 0.0, %v636
    %v647 = vsub.f32 0.0, %v643
    %v648 = vld [vmem:[%s4] sm:$0x3]
    %v650 = vlaneseq
    %v651 = vshrl.u32 %v650, 7
    %v652 = vsub.s32 0, %v651
    %v653 = vrot.slane %v648, %v652
    %v654 = vlaneseq
    %v655 = vshrl.u32 %v654, 7
    %v656 = vsub.s32 1, %v655
    %v657 = vrot.slane %v648, %v656
    %v660 = vmul.f32 %v644, %v653
    %v661 = vmul.f32 %v645, %v657
    %v662 = vmul.f32 %v646, %v653
    %v663 = vmul.f32 %v647, %v657
    %v664 = vmul.f32 %v660, 1.442695
    %v665 = vpow.pop %v664
    %v666 = vmul.f32 %v661, 1.442695
    %v667 = vpow.pop %v666
    %v668 = vmul.f32 %v662, 1.442695
    %v669 = vpow.pop %v668
    %v670 = vmul.f32 %v663, 1.442695
    %v671 = vpow.pop %v670
    %v672 = vld [vmem:[#allocation8] sm:$0xff]
    %v673 = vld [vmem:[#allocation8 + $0x8] sm:$0xff]
    %v674 = vld [vmem:[#allocation8 + $0x10] sm:$0xff]
    %v675 = vld [vmem:[#allocation8 + $0x18] sm:$0xff]
    %v676 = vld [vmem:[#allocation8 + $0x20] sm:$0xff]
    %v677 = vld [vmem:[#allocation8 + $0x28] sm:$0xff]
    %v678 = vld [vmem:[#allocation8 + $0x30] sm:$0xff]
    %v679 = vld [vmem:[#allocation8 + $0x38] sm:$0xff]
    %v680 = vld [vmem:[#allocation8 + $0x40] sm:$0xff]
    %v681 = vld [vmem:[#allocation8 + $0x48] sm:$0xff]
    %v682 = vld [vmem:[#allocation8 + $0x50] sm:$0xff]
    %v683 = vld [vmem:[#allocation8 + $0x58] sm:$0xff]
    %v684 = vld [vmem:[#allocation8 + $0x60] sm:$0xff]
    %v685 = vld [vmem:[#allocation8 + $0x68] sm:$0xff]
    %v686 = vld [vmem:[#allocation8 + $0x70] sm:$0xff]
    %v687 = vld [vmem:[#allocation8 + $0x78] sm:$0xff]
    %v688 = vld [vmem:[#allocation8 + $0x80] sm:$0xff]
    %v689 = vld [vmem:[#allocation8 + $0x88] sm:$0xff]
    %v690 = vld [vmem:[#allocation8 + $0x90] sm:$0xff]
    %v691 = vld [vmem:[#allocation8 + $0x98] sm:$0xff]
    %v692 = vld [vmem:[#allocation8 + $0xa0] sm:$0xff]
    %v693 = vld [vmem:[#allocation8 + $0xa8] sm:$0xff]
    %v694 = vld [vmem:[#allocation8 + $0xb0] sm:$0xff]
    %v695 = vld [vmem:[#allocation8 + $0xb8] sm:$0xff]
    %v696 = vld [vmem:[#allocation8 + $0xc0] sm:$0xff]
    %v697 = vld [vmem:[#allocation8 + $0xc8] sm:$0xff]
    %v698 = vld [vmem:[#allocation8 + $0xd0] sm:$0xff]
    %v699 = vld [vmem:[#allocation8 + $0xd8] sm:$0xff]
    %v700 = vld [vmem:[#allocation8 + $0xe0] sm:$0xff]
    %v701 = vld [vmem:[#allocation8 + $0xe8] sm:$0xff]
    %v702 = vld [vmem:[#allocation8 + $0xf0] sm:$0xff]
    %v703 = vld [vmem:[#allocation8 + $0xf8] sm:$0xff]
    %v704 = vld [vmem:[%s6] sm:$0x1]
    %v706 = vlaneseq
    %v707 = vshrl.u32 %v706, 7
    %v708 = vsub.s32 0, %v707
    %v709 = vrot.slane %v704, %v708
    %711 = vmatprep.subr.mxu0 0.0
    %712 = vmatpush1.msra.mxu0 %v672
    %713 = vmatprep.subr.mxu0 0.0
    %714 = vmatpush1.msra.mxu0 %v673
    %715 = vmatprep.subr.mxu0 0.0
    %716 = vmatpush1.msra.mxu0 %v674
    %717 = vmatprep.subr.mxu0 0.0
    %718 = vmatpush1.msra.mxu0 %v675
    %719 = vmatprep.subr.mxu0 0.0
    %720 = vmatpush1.msra.mxu0 %v676
    %721 = vmatprep.subr.mxu0 0.0
    %722 = vmatpush1.msra.mxu0 %v677
    %723 = vmatprep.subr.mxu0 0.0
    %724 = vmatpush1.msra.mxu0 %v678
    %725 = vmatprep.subr.mxu0 0.0
    %726 = vmatpush1.msra.mxu0 %v679
    %727 = vmatprep.subr.mxu0 0.0
    %728 = vmatpush1.msra.mxu0 %v680
    %729 = vmatprep.subr.mxu0 0.0
    %730 = vmatpush1.msra.mxu0 %v681
    %731 = vmatprep.subr.mxu0 0.0
    %732 = vmatpush1.msra.mxu0 %v682
    %733 = vmatprep.subr.mxu0 0.0
    %734 = vmatpush1.msra.mxu0 %v683
    %735 = vmatprep.subr.mxu0 0.0
    %736 = vmatpush1.msra.mxu0 %v684
    %737 = vmatprep.subr.mxu0 0.0
    %738 = vmatpush1.msra.mxu0 %v685
    %739 = vmatprep.subr.mxu0 0.0
    %740 = vmatpush1.msra.mxu0 %v686
    %741 = vmatprep.subr.mxu0 0.0
    %742 = vmatpush1.msra.mxu0 %v687
    %743 = vmatprep.subr.mxu0 0.0
    %744 = vmatpush1.msra.mxu0 %v688
    %745 = vmatprep.subr.mxu0 0.0
    %746 = vmatpush1.msra.mxu0 %v689
    %747 = vmatprep.subr.mxu0 0.0
    %748 = vmatpush1.msra.mxu0 %v690
    %749 = vmatprep.subr.mxu0 0.0
    %750 = vmatpush1.msra.mxu0 %v691
    %751 = vmatprep.subr.mxu0 0.0
    %752 = vmatpush1.msra.mxu0 %v692
    %753 = vmatprep.subr.mxu0 0.0
    %754 = vmatpush1.msra.mxu0 %v693
    %755 = vmatprep.subr.mxu0 0.0
    %756 = vmatpush1.msra.mxu0 %v694
    %757 = vmatprep.subr.mxu0 0.0
    %758 = vmatpush1.msra.mxu0 %v695
    %759 = vmatprep.subr.mxu0 0.0
    %760 = vmatpush1.msra.mxu0 %v696
    %761 = vmatprep.subr.mxu0 0.0
    %762 = vmatpush1.msra.mxu0 %v697
    %763 = vmatprep.subr.mxu0 0.0
    %764 = vmatpush1.msra.mxu0 %v698
    %765 = vmatprep.subr.mxu0 0.0
    %766 = vmatpush1.msra.mxu0 %v699
    %767 = vmatprep.subr.mxu0 0.0
    %768 = vmatpush1.msra.mxu0 %v700
    %769 = vmatprep.subr.mxu0 0.0
    %770 = vmatpush1.msra.mxu0 %v701
    %771 = vmatprep.subr.mxu0 0.0
    %772 = vmatpush1.msra.mxu0 %v702
    %773 = vmatprep.subr.mxu0 0.0
    %774 = vmatpush1.msra.mxu0 %v703
    %775 = vmatprep.mubr.f32.mxu0 %v667
    %776 = vmatmul.mubr.f32.gmra.mrb[0].mxu0 %v665
    %v777 = vpop.f32.mrb[0].mxu0
    %v778 = vadd.f32 %v709, %v777
    %v779 = vpop.f32.mrb[0].mxu0
    %780 = vmatprep.mubr.f32.mxu0 %v671
    %781 = vmatmul.mubr.f32.gmra.mrb[0].mxu0 %v669
    %v782 = vpop.f32.mrb[0].mxu0
    %v783 = vadd.f32 %v709, %v782
    %v784 = vpop.f32.mrb[0].mxu0
    %785 = vdwg.mxu0
    %786 = vst [vmem:[#allocation10] sm:$0xff] %v778
    %787 = vst [vmem:[#allocation10 + $0x8] sm:$0xff] %v783
    // Predicated region
    $region46: #{tpu_custom_call.1} parent=1 // pred_check
      _
    $region47: #{tpu_custom_call.1} parent=1 // pred_check_branch
      %789 = sbr.rel (0) target = $region49
    $region48: #{tpu_custom_call.1} parent=1 // pred_region
      %s791 = ssub.s32 256, 256
      %792 = vsyncadd [#allocation4], %s791
      %s793 = sshll.u32 [#allocation10], 4
      %s794 = int_to_ptr.vmem [resolvable:$true] %s793
      %799 = dma.vmem_to_hbm [thread:$0]  %s794, 256, %s7, [#allocation4], 128, 128, 8
    $region49: #{tpu_custom_call.1} parent=1 // pred_fallthru
      _
    // Predicated region
    $region50: #{tpu_custom_call.1} parent=1 // pred_check
      _
    $region51: #{tpu_custom_call.1} parent=1 // pred_check_branch
      %801 = sbr.rel (0) target = $region53
    $region52: #{tpu_custom_call.1} parent=1 // pred_region
      %802 = dma.done [#allocation4], 256
    $region53: #{tpu_custom_call.1} parent=1 // pred_fallthru
      _
    %803 = vsyncpa [#allocation3], 1
    %804 = vsyncpa [#allocation6], 1
    %805 = vsyncpa [#allocation9], 1
    %806 = vsyncpa [#allocation4], 1

</llo_original>
